<compile_context>
chip_gen: v7x
topology: tpu7x:2x2x1
jax: 0.10.0
libtpu: 0.0.40
codegen_flags: <defaults>
</compile_context>

<pallas_src>
import jax
import jax.numpy as jnp
from jax import lax
from jax.experimental import pallas as pl
from jax.experimental.pallas import tpu as pltpu

ALPHA = 0.2            # LeakyReLU slope used by MCH_AttnBlock
NEG_INF = -9e15        # zero_vec constant from the PyTorch code
BN_EPS = 1e-5


# --------------------------------- kernel ------------------------------------
def _mch_kernel(h_ref, mask_ref, edge_ref, wbig_ref, wc1_ref, wc2_ref, bn_ref,
                out_ref, hp_scr):
    """One batch chunk: all heads' attention + fused LightweightResidualBlock."""
    Bt, N, Din = h_ref.shape
    H = edge_ref.shape[0]
    HF = out_ref.shape[-1]
    F = HF // H
    M = Bt * N
    f32 = jnp.float32
    bf16 = jnp.bfloat16

    # ---- fused node projection: one bf16 MXU push for all heads + a1/a2 folds.
    # wbig columns: [0 : H*F] = per-head W, [H*F : H*F+H] = W@a1, [...+H] = W@a2.
    h2d = h_ref[...].reshape(M, Din)                                  # bf16
    proj = jnp.dot(h2d, wbig_ref[...], preferred_element_type=f32)    # (M,HF+2H)

    mask = mask_ref[...].astype(f32)                                  # (Bt,N,N)

    # ---- per-head attention scores / softmax (tiny VPU work); the per-head
    #      result is streamed into its lane slice of the scratch so only one
    #      head's intermediates stay live at a time.  H is small and static.
    for hh in range(H):
        Wh3 = proj[:, hh * F:(hh + 1) * F].reshape(Bt, N, F)
        wh1 = proj[:, HF + hh:HF + hh + 1].reshape(Bt, N, 1)
        wh2 = proj[:, HF + H + hh:HF + H + hh + 1].reshape(Bt, N, 1)
        edge = edge_ref[hh].astype(f32)                               # (Bt,N,N)

        e = wh1 + jnp.swapaxes(wh2, 1, 2) + edge
        e = jnp.where(e > 0, e, ALPHA * e)                            # LeakyReLU
        logits = jnp.where(mask > 0, e, NEG_INF)
        m = jnp.max(logits, axis=-1, keepdims=True)
        p = jnp.exp(logits - m)
        inv = pl.reciprocal(jnp.sum(p, axis=-1, keepdims=True), approx=True)
        att = p * inv                                                 # softmax
        # TODO(synk): dropout on h and on the attention matrix is the identity
        # (eval mode); training-mode dropout is not implemented.

        hp = jnp.einsum('bqk,bkf->bqf', att.astype(bf16), Wh3.astype(bf16),
                        preferred_element_type=f32)                   # (Bt,N,F)
        hp_scr[:, hh * F:(hh + 1) * F] = hp.reshape(M, F)

    hp_all = hp_scr[...]                                              # (M,HF)

    # ---- LightweightResidualBlock (stride=1, identity shortcut), all heads
    #      fused via block-diagonal per-tap weights on (M, H*F) activations.
    local = lax.broadcasted_iota(jnp.int32, (M, 1), 0) % N
    not_first = (local != 0).astype(f32)            # zero the row that crossed
    not_last = (local != (N - 1)).astype(f32)       # a graph boundary

    def conv_bn(x, wt_ref, scale, shift):
        xp = pltpu.roll(x, shift=1, axis=0) * not_first       # x[l-1]
        xn = pltpu.roll(x, shift=M - 1, axis=0) * not_last    # x[l+1]
        y = (jnp.dot(xp.astype(bf16), wt_ref[0], preferred_element_type=f32)
             + jnp.dot(x.astype(bf16), wt_ref[1], preferred_element_type=f32)
             + jnp.dot(xn.astype(bf16), wt_ref[2], preferred_element_type=f32))
        return y * scale + shift                              # eval-mode BN
        # TODO(synk): BatchNorm uses eval-mode running stats (fresh init);
        # training-mode batch statistics are not implemented.

    y = jnp.maximum(conv_bn(hp_all, wc1_ref, bn_ref[0:1, :], bn_ref[1:2, :]), 0.)
    y = conv_bn(y, wc2_ref, bn_ref[2:3, :], bn_ref[3:4, :])
    y = jnp.maximum(y + hp_all, 0.)                            # residual + ReLU

    out_ref[...] = y.reshape(Bt, N, HF).astype(out_ref.dtype)


# ----------------------------- tiling heuristics ------------------------------
def _pad_block_bytes(shape, itemsize):
    """(sublane, 128)-tile-padded VMEM bytes of one buffer of `shape`."""
    if len(shape) < 2:
        shape = (1,) * (2 - len(shape)) + tuple(shape)
    lead = 1
    for s in shape[:-2]:
        lead *= s
    sub = 8 * max(1, 4 // itemsize)                 # 8 rows f32, 16 rows bf16
    s2 = ((shape[-2] + sub - 1) // sub) * sub
    s1 = ((shape[-1] + 127) // 128) * 128
    return lead * s2 * s1 * itemsize


def _pick_bt(B, N, Din, H, F, budget_bytes=24 << 20):
    """Largest batch-chunk Bt (divisor of B) such that the grid keeps >=2
    (ideally >=4) steps for v7x megacore / pipelining, and the padded,
    double-buffered VMEM footprint (blocks + temporaries) fits the budget."""
    HF = H * F

    def footprint(bt):
        m = bt * N
        blocks = [                        # (shape, itemsize) -- double-buffered
            ((bt, N, Din), 2),            # h (bf16)
            ((bt, N, N), 2),              # mask (bf16)
            ((H, bt, N, N), 2),           # precomputed edge logits (bf16)
            ((Din, HF + 2 * H), 2),       # fused node weights (bf16)
            ((3, HF, HF), 2),             # conv1 block-diag taps (bf16)
            ((3, HF, HF), 2),             # conv2 block-diag taps (bf16)
            ((4, HF), 4),                 # bn scale/shift (f32)
            ((bt, N, HF), 4),             # output (f32)
        ]
        total = sum(2 * _pad_block_bytes(s, isz) for s, isz in blocks)
        # single-buffered scratch + rough f32 in-kernel temporaries
        total += _pad_block_bytes((m, HF), 4)                 # hp scratch
        total += _pad_block_bytes((m, HF + 2 * H), 4)         # node projection
        total += 4 * _pad_block_bytes((bt, N, N), 4)          # e/logits/p/att
        total += 4 * _pad_block_bytes((m, HF), 4)             # conv temporaries
        return total

    if B >= 4:
        max_bt = B // 4
    elif B >= 2:
        max_bt = B // 2
    else:
        max_bt = 1
    best = 1
    for d in range(1, max_bt + 1):
        if B % d == 0 and footprint(d) <= budget_bytes:
            best = d
    return best


# --------------------------------- wrapper ------------------------------------
def mch_multihead_attn_block(h, mch_mask, comp_val, params):
    """Pallas implementation of MCH_MultiHeadAttnBlock.forward
    (concat=True, activation=None, eval mode)."""
    B, N, Din = h.shape
    H, _, F = params["W"].shape
    HF = H * F
    f32, bf16 = jnp.float32, jnp.bfloat16

    # Fold a3 into W_edge and precompute the edge logits in the wrapper so the
    # tiny edge_dim never reaches the kernel's lane axis:  (H, B, N, N).
    ea = jnp.einsum('hef,hf->he', params["W_edge"], params["a3"][:, 0, :])
    edge = jnp.einsum('bqke,he->hbqk', comp_val, ea)

    # Fuse all heads' node projections plus the a1/a2 folds into one weight.
    W_all = jnp.transpose(params["W"], (1, 0, 2)).reshape(Din, HF)
    wa1 = jnp.einsum('hdf,hf->dh', params["W"], params["a1"][:, 0, :])
    wa2 = jnp.einsum('hdf,hf->dh', params["W"], params["a2"][:, 0, :])
    wbig = jnp.concatenate([W_all, wa1, wa2], axis=1)          # (Din, HF+2H)

    # Block-diagonal per-tap conv weights: all heads share one (HF,HF) matmul.
    def block_diag(w):                                          # (H, F, F)
        eye = jnp.eye(H, dtype=w.dtype)
        return jnp.einsum('hg,hab->hagb', eye, w).reshape(HF, HF)
    wc1 = jnp.stack([block_diag(params["conv1_w"][:, k]) for k in range(3)])
    wc2 = jnp.stack([block_diag(params["conv2_w"][:, k]) for k in range(3)])

    def cat_heads(p):                                           # (H,1,F)->(1,HF)
        return p[:, 0, :].reshape(1, HF)
    bn = jnp.concatenate([cat_heads(params["bn1_scale"]),
                          cat_heads(params["bn1_shift"]),
                          cat_heads(params["bn2_scale"]),
                          cat_heads(params["bn2_shift"])], axis=0)   # (4, HF)

    Bt = _pick_bt(B, N, Din, H, F)
    grid = (B // Bt,)

    out = pl.pallas_call(
        _mch_kernel,
        out_shape=jax.ShapeDtypeStruct((B, N, HF), jnp.float32),
        grid_spec=pltpu.PrefetchScalarGridSpec(
            num_scalar_prefetch=0,
            grid=grid,
            in_specs=[
                pl.BlockSpec((Bt, N, Din), lambda b: (b, 0, 0)),      # h
                pl.BlockSpec((Bt, N, N), lambda b: (b, 0, 0)),        # mask
                pl.BlockSpec((H, Bt, N, N), lambda b: (0, b, 0, 0)),  # edge
                pl.BlockSpec((Din, HF + 2 * H), lambda b: (0, 0)),    # fused W
                pl.BlockSpec((3, HF, HF), lambda b: (0, 0, 0)),       # conv1
                pl.BlockSpec((3, HF, HF), lambda b: (0, 0, 0)),       # conv2
                pl.BlockSpec((4, HF), lambda b: (0, 0)),              # bn
            ],
            out_specs=pl.BlockSpec((Bt, N, HF), lambda b: (b, 0, 0)),
            scratch_shapes=[pltpu.VMEM((Bt * N, HF), jnp.float32)],
        ),
        compiler_params=pltpu.CompilerParams(
            dimension_semantics=("parallel",),
            vmem_limit_bytes=48 << 20),
    )(h.astype(bf16), mch_mask.astype(bf16), edge.astype(bf16),
      wbig.astype(bf16), wc1.astype(bf16), wc2.astype(bf16), bn.astype(f32))
    return out  # activation=None, heads already concatenated on the last dim


# ----------------------------- parameters ------------------------------------
def init_params(key, node_dim, edge_dim, out_dim, num_heads):
    def xavier(k, shape, gain):
        fan_in, fan_out = shape[-2], shape[-1]
        limit = gain * (6.0 / (fan_in + fan_out)) ** 0.5
        return jax.random.uniform(k, shape, jnp.float32, -limit, limit)

    keys = jax.random.split(key, 5)
    gain = 1.414
    W = xavier(keys[0], (num_heads, node_dim, out_dim), gain)
    W_edge = xavier(keys[1], (num_heads, edge_dim, out_dim), gain)
    a = xavier(keys[2], (num_heads, 3 * out_dim, 1), gain)
    a1 = jnp.transpose(a[:, :out_dim, :], (0, 2, 1))              # (H, 1, F)
    a2 = jnp.transpose(a[:, out_dim:2 * out_dim, :], (0, 2, 1))   # (H, 1, F)
    a3 = jnp.transpose(a[:, 2 * out_dim:, :], (0, 2, 1))          # (H, 1, F)

    def conv_init(k, shape):  # torch Conv1d default init bound: 1/sqrt(fan_in)
        fan_in = shape[-2] * shape[-1]
        bound = 1.0 / (fan_in ** 0.5)
        return jax.random.uniform(k, shape, jnp.float32, -bound, bound)

    conv1 = conv_init(keys[3], (num_heads, out_dim, out_dim, 3))  # (H,Cout,Cin,K)
    conv2 = conv_init(keys[4], (num_heads, out_dim, out_dim, 3))
    # rearrange to (H, K, Cin, Cout): each tap is a (F_in, F_out) matmul weight.
    conv1_w = jnp.transpose(conv1, (0, 3, 2, 1))
    conv2_w = jnp.transpose(conv2, (0, 3, 2, 1))

    # eval-mode BatchNorm with fresh stats: y = gamma*(x-mean)/sqrt(var+eps)+beta
    scale = jnp.full((num_heads, 1, out_dim), 1.0 / (1.0 + BN_EPS) ** 0.5,
                     jnp.float32)
    shift = jnp.zeros((num_heads, 1, out_dim), jnp.float32)
    return dict(W=W, W_edge=W_edge, a1=a1, a2=a2, a3=a3,
                conv1_w=conv1_w, conv2_w=conv2_w,
                bn1_scale=scale, bn1_shift=shift,
                bn2_scale=scale, bn2_shift=shift)


# ----------------------------- pure-JAX reference ----------------------------
def reference(h, mask, comp_val, params):
    H = params["W"].shape[0]
    outs = []
    for i in range(H):
        Wh = h @ params["W"][i]                                    # (B,N,F)
        Wedge = comp_val @ params["W_edge"][i]                     # (B,N,N,F)
        wh1 = jnp.sum(Wh * params["a1"][i], -1, keepdims=True)     # (B,N,1)
        wh2 = jnp.sum(Wh * params["a2"][i], -1, keepdims=True)     # (B,N,1)
        edge = jnp.sum(Wedge * params["a3"][i], -1)                # (B,N,N)
        e = wh1 + jnp.swapaxes(wh2, -1, -2) + edge
        e = jnp.where(e > 0, e, ALPHA * e)
        logits = jnp.where(mask > 0, e, NEG_INF)
        att = jax.nn.softmax(logits, axis=-1)
        x = att @ Wh                                               # (B,N,F)

        def conv_bn(x, wk, s, b):
            zero = jnp.zeros_like(x[:, :1])
            xp = jnp.concatenate([zero, x[:, :-1]], axis=1)
            xn = jnp.concatenate([x[:, 1:], zero], axis=1)
            y = xp @ wk[0] + x @ wk[1] + xn @ wk[2]
            return y * s + b

        y = jax.nn.relu(conv_bn(x, params["conv1_w"][i],
                                params["bn1_scale"][i], params["bn1_shift"][i]))
        y = conv_bn(y, params["conv2_w"][i],
                    params["bn2_scale"][i], params["bn2_shift"][i]) + x
        outs.append(jax.nn.relu(y))
    return jnp.concatenate(outs, axis=-1)


if __name__ == "__main__":
    B, N = 2, 8
    node_dim, edge_dim, out_dim, num_heads = 16, 4, 32, 2

    key = jax.random.PRNGKey(0)
    k_h, k_m, k_c, k_p = jax.random.split(key, 4)
    h = jax.random.normal(k_h, (B, N, node_dim), jnp.float32)
    mch_mask = (jax.random.uniform(k_m, (B, N, N)) > 0.3).astype(jnp.float32)
    comp_val = jax.random.normal(k_c, (B, N, N, edge_dim), jnp.float32)
    params = init_params(k_p, node_dim, edge_dim, out_dim, num_heads)

    out = mch_multihead_attn_block(h, mch_mask, comp_val, params)
    out = jax.block_until_ready(out)

    ref = reference(h, mch_mask, comp_val, params)
    assert out.shape == (B, N, num_heads * out_dim), out.shape
    assert bool(jnp.all(jnp.isfinite(out)))
    max_err = float(jnp.max(jnp.abs(out - ref)))
    assert jnp.allclose(out, ref, rtol=5e-2, atol=5e-2), max_err

    print("KERNEL_OK")
</pallas_src>

<mosaic_0001>
module attributes {stable_mosaic.version = 11 : i64} {
  func.func @_mch_kernel(%arg0: i32, %arg1: memref<1x8x16xbf16, #tpu.memory_space<vmem>>, %arg2: memref<1x8x8xbf16, #tpu.memory_space<vmem>>, %arg3: memref<2x1x8x8xbf16, #tpu.memory_space<vmem>>, %arg4: memref<16x68xbf16, #tpu.memory_space<vmem>>, %arg5: memref<3x64x64xbf16, #tpu.memory_space<vmem>>, %arg6: memref<3x64x64xbf16, #tpu.memory_space<vmem>>, %arg7: memref<4x64xf32, #tpu.memory_space<vmem>>, %arg8: memref<1x8x64xf32, #tpu.memory_space<vmem>>, %arg9: memref<8x64xf32, #tpu.memory_space<vmem>>) attributes {dimension_semantics = [#tpu.dimension_semantics<parallel>], iteration_bounds = array<i64: 2>, scalar_prefetch = 0 : i64, scratch_operands = 1 : i64, tpu.core_type = #tpu.core_type<tc>, window_params = [{transform_indices = @transform_0, window_bounds = array<i64: 1, 8, 16>}, {transform_indices = @transform_1, window_bounds = array<i64: 1, 8, 8>}, {transform_indices = @transform_2, window_bounds = array<i64: 2, 1, 8, 8>}, {pipeline_mode = #tpu.pipeline_mode<synchronous>, transform_indices = @transform_3, window_bounds = array<i64: 16, 68>}, {pipeline_mode = #tpu.pipeline_mode<synchronous>, transform_indices = @transform_4, window_bounds = array<i64: 3, 64, 64>}, {pipeline_mode = #tpu.pipeline_mode<synchronous>, transform_indices = @transform_5, window_bounds = array<i64: 3, 64, 64>}, {pipeline_mode = #tpu.pipeline_mode<synchronous>, transform_indices = @transform_6, window_bounds = array<i64: 4, 64>}, {transform_indices = @transform_7, window_bounds = array<i64: 1, 8, 64>}]} {
    %c0 = arith.constant 0 : index
    %c0_0 = arith.constant 0 : index
    %c0_1 = arith.constant 0 : index
    %0 = vector.load %arg1[%c0, %c0_0, %c0_1] : memref<1x8x16xbf16, #tpu.memory_space<vmem>>, vector<1x8x16xbf16>
    %1 = vector.shape_cast %0 : vector<1x8x16xbf16> to vector<8x16xbf16>
    %c0_2 = arith.constant 0 : index
    %c0_3 = arith.constant 0 : index
    %2 = vector.load %arg4[%c0_2, %c0_3] : memref<16x68xbf16, #tpu.memory_space<vmem>>, vector<16x68xbf16>
    %cst = arith.constant dense<0.000000e+00> : vector<8x68xf32>
    %3 = tpu.matmul %1, %2, %cst {dimension_numbers = #tpu.dot_dimension_numbers<[1], [0], [0], [1], [0, 0, 1, 1], [], []>} : vector<8x16xbf16>, vector<16x68xbf16>, vector<8x68xf32> -> vector<8x68xf32>
    %c0_4 = arith.constant 0 : index
    %c0_5 = arith.constant 0 : index
    %c0_6 = arith.constant 0 : index
    %4 = vector.load %arg2[%c0_4, %c0_5, %c0_6] : memref<1x8x8xbf16, #tpu.memory_space<vmem>>, vector<1x8x8xbf16>
    %5 = arith.extf %4 : vector<1x8x8xbf16> to vector<1x8x8xf32>
    %6 = vector.extract_strided_slice %3 {offsets = [0, 0], sizes = [8, 32], strides = [1, 1]} : vector<8x68xf32> to vector<8x32xf32>
    %7 = vector.shape_cast %6 : vector<8x32xf32> to vector<1x8x32xf32>
    %8 = vector.extract_strided_slice %3 {offsets = [0, 64], sizes = [8, 1], strides = [1, 1]} : vector<8x68xf32> to vector<8x1xf32>
    %9 = vector.shape_cast %8 : vector<8x1xf32> to vector<1x8x1xf32>
    %10 = vector.extract_strided_slice %3 {offsets = [0, 66], sizes = [8, 1], strides = [1, 1]} : vector<8x68xf32> to vector<8x1xf32>
    %11 = vector.shape_cast %10 : vector<8x1xf32> to vector<1x8x1xf32>
    %c0_7 = arith.constant 0 : index
    %c0_8 = arith.constant 0 : index
    %c0_9 = arith.constant 0 : index
    %c0_10 = arith.constant 0 : index
    %12 = vector.load %arg3[%c0_7, %c0_8, %c0_9, %c0_10] : memref<2x1x8x8xbf16, #tpu.memory_space<vmem>>, vector<1x1x8x8xbf16>
    %13 = vector.shape_cast %12 : vector<1x1x8x8xbf16> to vector<1x8x8xbf16>
    %14 = arith.extf %13 : vector<1x8x8xbf16> to vector<1x8x8xf32>
    %15 = tpu.transpose %11, [0, 2, 1] : vector<1x8x1xf32> -> vector<1x1x8xf32>
    %16 = vector.broadcast %9 : vector<1x8x1xf32> to vector<1x8x8xf32>
    %17 = vector.broadcast %15 : vector<1x1x8xf32> to vector<1x8x8xf32>
    %18 = arith.addf %16, %17 : vector<1x8x8xf32>
    %19 = arith.addf %18, %14 : vector<1x8x8xf32>
    %cst_11 = arith.constant 0.000000e+00 : f32
    %20 = vector.broadcast %cst_11 : f32 to vector<1x8x8xf32>
    %21 = arith.cmpf ogt, %19, %20 : vector<1x8x8xf32>
    %cst_12 = arith.constant 2.000000e-01 : f32
    %22 = vector.broadcast %cst_12 : f32 to vector<1x8x8xf32>
    %23 = arith.mulf %22, %19 : vector<1x8x8xf32>
    %24 = arith.select %21, %19, %23 : vector<1x8x8xi1>, vector<1x8x8xf32>
    %cst_13 = arith.constant 0.000000e+00 : f32
    %25 = vector.broadcast %cst_13 : f32 to vector<1x8x8xf32>
    %26 = arith.cmpf ogt, %5, %25 : vector<1x8x8xf32>
    %cst_14 = arith.constant -9.000000e+15 : f32
    %27 = vector.broadcast %cst_14 : f32 to vector<1x8x8xf32>
    %28 = arith.select %26, %24, %27 : vector<1x8x8xi1>, vector<1x8x8xf32>
    %cst_15 = arith.constant dense<0xFF800000> : vector<1x8xf32>
    %29 = vector.multi_reduction <maximumf>, %28, %cst_15 [2] : vector<1x8x8xf32> to vector<1x8xf32>
    %30 = vector.shape_cast %29 : vector<1x8xf32> to vector<1x8x1xf32>
    %31 = vector.broadcast %30 : vector<1x8x1xf32> to vector<1x8x8xf32>
    %32 = arith.subf %28, %31 : vector<1x8x8xf32>
    %33 = math.exp %32 : vector<1x8x8xf32>
    %cst_16 = arith.constant dense<0.000000e+00> : vector<1x8xf32>
    %34 = vector.multi_reduction <add>, %33, %cst_16 [2] : vector<1x8x8xf32> to vector<1x8xf32>
    %35 = vector.shape_cast %34 : vector<1x8xf32> to vector<1x8x1xf32>
    %36 = tpu.reciprocal %35 {approx = true} : vector<1x8x1xf32> -> vector<1x8x1xf32>
    %37 = vector.broadcast %36 : vector<1x8x1xf32> to vector<1x8x8xf32>
    %38 = arith.mulf %33, %37 : vector<1x8x8xf32>
    %39 = arith.truncf %38 : vector<1x8x8xf32> to vector<1x8x8xbf16>
    %40 = arith.truncf %7 : vector<1x8x32xf32> to vector<1x8x32xbf16>
    "tpu.trace_start"() <{level = 10 : i32, message = "bqk,bkf->bqf"}> : () -> ()
    %cst_17 = arith.constant dense<0.000000e+00> : vector<1x8x32xf32>
    %41 = tpu.matmul %39, %40, %cst_17 {dimension_numbers = #tpu.dot_dimension_numbers<[2], [1], [1], [2], [0, 0, 0, 1, 1, 2], [0], [0]>} : vector<1x8x8xbf16>, vector<1x8x32xbf16>, vector<1x8x32xf32> -> vector<1x8x32xf32>
    "tpu.trace_stop"() : () -> ()
    %42 = vector.shape_cast %41 : vector<1x8x32xf32> to vector<8x32xf32>
    %c0_18 = arith.constant 0 : index
    %c0_19 = arith.constant 0 : index
    %43 = vector.load %arg9[%c0_18, %c0_19] : memref<8x64xf32, #tpu.memory_space<vmem>>, vector<8x32xf32>
    tpu.vector_store %arg9[%c0_18, %c0_19], %42 {strides = array<i32>} : memref<8x64xf32, #tpu.memory_space<vmem>>, vector<8x32xf32>,
    %44 = vector.extract_strided_slice %3 {offsets = [0, 32], sizes = [8, 32], strides = [1, 1]} : vector<8x68xf32> to vector<8x32xf32>
    %45 = vector.shape_cast %44 : vector<8x32xf32> to vector<1x8x32xf32>
    %46 = vector.extract_strided_slice %3 {offsets = [0, 65], sizes = [8, 1], strides = [1, 1]} : vector<8x68xf32> to vector<8x1xf32>
    %47 = vector.shape_cast %46 : vector<8x1xf32> to vector<1x8x1xf32>
    %48 = vector.extract_strided_slice %3 {offsets = [0, 67], sizes = [8, 1], strides = [1, 1]} : vector<8x68xf32> to vector<8x1xf32>
    %49 = vector.shape_cast %48 : vector<8x1xf32> to vector<1x8x1xf32>
    %c1 = arith.constant 1 : index
    %c0_20 = arith.constant 0 : index
    %c0_21 = arith.constant 0 : index
    %c0_22 = arith.constant 0 : index
    %50 = vector.load %arg3[%c1, %c0_20, %c0_21, %c0_22] : memref<2x1x8x8xbf16, #tpu.memory_space<vmem>>, vector<1x1x8x8xbf16>
    %51 = vector.shape_cast %50 : vector<1x1x8x8xbf16> to vector<1x8x8xbf16>
    %52 = arith.extf %51 : vector<1x8x8xbf16> to vector<1x8x8xf32>
    %53 = tpu.transpose %49, [0, 2, 1] : vector<1x8x1xf32> -> vector<1x1x8xf32>
    %54 = vector.broadcast %47 : vector<1x8x1xf32> to vector<1x8x8xf32>
    %55 = vector.broadcast %53 : vector<1x1x8xf32> to vector<1x8x8xf32>
    %56 = arith.addf %54, %55 : vector<1x8x8xf32>
    %57 = arith.addf %56, %52 : vector<1x8x8xf32>
    %cst_23 = arith.constant 0.000000e+00 : f32
    %58 = vector.broadcast %cst_23 : f32 to vector<1x8x8xf32>
    %59 = arith.cmpf ogt, %57, %58 : vector<1x8x8xf32>
    %cst_24 = arith.constant 2.000000e-01 : f32
    %60 = vector.broadcast %cst_24 : f32 to vector<1x8x8xf32>
    %61 = arith.mulf %60, %57 : vector<1x8x8xf32>
    %62 = arith.select %59, %57, %61 : vector<1x8x8xi1>, vector<1x8x8xf32>
    %cst_25 = arith.constant 0.000000e+00 : f32
    %63 = vector.broadcast %cst_25 : f32 to vector<1x8x8xf32>
    %64 = arith.cmpf ogt, %5, %63 : vector<1x8x8xf32>
    %cst_26 = arith.constant -9.000000e+15 : f32
    %65 = vector.broadcast %cst_26 : f32 to vector<1x8x8xf32>
    %66 = arith.select %64, %62, %65 : vector<1x8x8xi1>, vector<1x8x8xf32>
    %cst_27 = arith.constant dense<0xFF800000> : vector<1x8xf32>
    %67 = vector.multi_reduction <maximumf>, %66, %cst_27 [2] : vector<1x8x8xf32> to vector<1x8xf32>
    %68 = vector.shape_cast %67 : vector<1x8xf32> to vector<1x8x1xf32>
    %69 = vector.broadcast %68 : vector<1x8x1xf32> to vector<1x8x8xf32>
    %70 = arith.subf %66, %69 : vector<1x8x8xf32>
    %71 = math.exp %70 : vector<1x8x8xf32>
    %cst_28 = arith.constant dense<0.000000e+00> : vector<1x8xf32>
    %72 = vector.multi_reduction <add>, %71, %cst_28 [2] : vector<1x8x8xf32> to vector<1x8xf32>
    %73 = vector.shape_cast %72 : vector<1x8xf32> to vector<1x8x1xf32>
    %74 = tpu.reciprocal %73 {approx = true} : vector<1x8x1xf32> -> vector<1x8x1xf32>
    %75 = vector.broadcast %74 : vector<1x8x1xf32> to vector<1x8x8xf32>
    %76 = arith.mulf %71, %75 : vector<1x8x8xf32>
    %77 = arith.truncf %76 : vector<1x8x8xf32> to vector<1x8x8xbf16>
    %78 = arith.truncf %45 : vector<1x8x32xf32> to vector<1x8x32xbf16>
    "tpu.trace_start"() <{level = 10 : i32, message = "bqk,bkf->bqf"}> : () -> ()
    %cst_29 = arith.constant dense<0.000000e+00> : vector<1x8x32xf32>
    %79 = tpu.matmul %77, %78, %cst_29 {dimension_numbers = #tpu.dot_dimension_numbers<[2], [1], [1], [2], [0, 0, 0, 1, 1, 2], [0], [0]>} : vector<1x8x8xbf16>, vector<1x8x32xbf16>, vector<1x8x32xf32> -> vector<1x8x32xf32>
    "tpu.trace_stop"() : () -> ()
    %80 = vector.shape_cast %79 : vector<1x8x32xf32> to vector<8x32xf32>
    %c0_30 = arith.constant 0 : index
    %c32 = arith.constant 32 : index
    %81 = vector.load %arg9[%c0_30, %c32] : memref<8x64xf32, #tpu.memory_space<vmem>>, vector<8x32xf32>
    tpu.vector_store %arg9[%c0_30, %c32], %80 {strides = array<i32>} : memref<8x64xf32, #tpu.memory_space<vmem>>, vector<8x32xf32>,
    %c0_31 = arith.constant 0 : index
    %c0_32 = arith.constant 0 : index
    %82 = vector.load %arg9[%c0_31, %c0_32] : memref<8x64xf32, #tpu.memory_space<vmem>>, vector<8x64xf32>
    %83 = tpu.iota {dimensions = array<i32: 0>} : vector<8x1xi32>
    %c8_i32 = arith.constant 8 : i32
    %c0_i32 = arith.constant 0 : i32
    %84 = arith.cmpi eq, %c8_i32, %c0_i32 : i32
    %c1_i32 = arith.constant 1 : i32
    %85 = arith.select %84, %c1_i32, %c8_i32 : i32
    %86 = vector.broadcast %85 : i32 to vector<8x1xi32>
    %87 = arith.remsi %83, %86 : vector<8x1xi32>
    %c0_i32_33 = arith.constant 0 : i32
    %88 = vector.broadcast %c0_i32_33 : i32 to vector<8x1xi32>
    %89 = arith.cmpi ne, %87, %88 : vector<8x1xi32>
    %c0_i32_34 = arith.constant 0 : i32
    %90 = vector.broadcast %c0_i32_34 : i32 to vector<8x1xi32>
    %91 = arith.cmpi slt, %87, %90 : vector<8x1xi32>
    %c0_i32_35 = arith.constant 0 : i32
    %92 = arith.cmpi slt, %85, %c0_i32_35 : i32
    %93 = vector.broadcast %92 : i1 to vector<8x1xi1>
    %94 = vector.broadcast %93 : vector<8x1xi1> to vector<8x1xi1>
    %95 = arith.xori %91, %94 : vector<8x1xi1>
    %96 = arith.andi %95, %89 : vector<8x1xi1>
    %97 = vector.broadcast %85 : i32 to vector<8x1xi32>
    %98 = arith.addi %87, %97 : vector<8x1xi32>
    %99 = arith.select %96, %98, %87 : vector<8x1xi1>, vector<8x1xi32>
    %c0_i32_36 = arith.constant 0 : i32
    %100 = vector.broadcast %c0_i32_36 : i32 to vector<8x1xi32>
    %101 = arith.cmpi ne, %99, %100 : vector<8x1xi32>
    %102 = arith.extui %101 : vector<8x1xi1> to vector<8x1xi32>
    %103 = arith.sitofp %102 : vector<8x1xi32> to vector<8x1xf32>
    %c7_i32 = arith.constant 7 : i32
    %104 = vector.broadcast %c7_i32 : i32 to vector<8x1xi32>
    %105 = arith.cmpi ne, %99, %104 : vector<8x1xi32>
    %106 = arith.extui %105 : vector<8x1xi1> to vector<8x1xi32>
    %107 = arith.sitofp %106 : vector<8x1xi32> to vector<8x1xf32>
    %c0_37 = arith.constant 0 : index
    %c0_38 = arith.constant 0 : index
    %108 = vector.load %arg7[%c0_37, %c0_38] : memref<4x64xf32, #tpu.memory_space<vmem>>, vector<1x64xf32>
    %c1_39 = arith.constant 1 : index
    %c0_40 = arith.constant 0 : index
    %109 = vector.load %arg7[%c1_39, %c0_40] : memref<4x64xf32, #tpu.memory_space<vmem>>, vector<1x64xf32>
    %c1_i32_41 = arith.constant 1 : i32
    %110 = tpu.dynamic_rotate %82 by %c1_i32_41 dim 0 : vector<8x64xf32>, i32 -> vector<8x64xf32>
    %111 = vector.broadcast %103 : vector<8x1xf32> to vector<8x64xf32>
    %112 = arith.mulf %110, %111 : vector<8x64xf32>
    %c7_i32_42 = arith.constant 7 : i32
    %113 = tpu.dynamic_rotate %82 by %c7_i32_42 dim 0 : vector<8x64xf32>, i32 -> vector<8x64xf32>
    %114 = vector.broadcast %107 : vector<8x1xf32> to vector<8x64xf32>
    %115 = arith.mulf %113, %114 : vector<8x64xf32>
    %116 = arith.truncf %112 : vector<8x64xf32> to vector<8x64xbf16>
    %c0_43 = arith.constant 0 : index
    %c0_44 = arith.constant 0 : index
    %c0_45 = arith.constant 0 : index
    %117 = vector.load %arg5[%c0_43, %c0_44, %c0_45] : memref<3x64x64xbf16, #tpu.memory_space<vmem>>, vector<1x64x64xbf16>
    %118 = vector.shape_cast %117 : vector<1x64x64xbf16> to vector<64x64xbf16>
    %cst_46 = arith.constant dense<0.000000e+00> : vector<8x64xf32>
    %119 = tpu.matmul %116, %118, %cst_46 {dimension_numbers = #tpu.dot_dimension_numbers<[1], [0], [0], [1], [0, 0, 1, 1], [], []>} : vector<8x64xbf16>, vector<64x64xbf16>, vector<8x64xf32> -> vector<8x64xf32>
    %120 = arith.truncf %82 : vector<8x64xf32> to vector<8x64xbf16>
    %c1_47 = arith.constant 1 : index
    %c0_48 = arith.constant 0 : index
    %c0_49 = arith.constant 0 : index
    %121 = vector.load %arg5[%c1_47, %c0_48, %c0_49] : memref<3x64x64xbf16, #tpu.memory_space<vmem>>, vector<1x64x64xbf16>
    %122 = vector.shape_cast %121 : vector<1x64x64xbf16> to vector<64x64xbf16>
    %cst_50 = arith.constant dense<0.000000e+00> : vector<8x64xf32>
    %123 = tpu.matmul %120, %122, %cst_50 {dimension_numbers = #tpu.dot_dimension_numbers<[1], [0], [0], [1], [0, 0, 1, 1], [], []>} : vector<8x64xbf16>, vector<64x64xbf16>, vector<8x64xf32> -> vector<8x64xf32>
    %124 = arith.addf %119, %123 : vector<8x64xf32>
    %125 = arith.truncf %115 : vector<8x64xf32> to vector<8x64xbf16>
    %c2 = arith.constant 2 : index
    %c0_51 = arith.constant 0 : index
    %c0_52 = arith.constant 0 : index
    %126 = vector.load %arg5[%c2, %c0_51, %c0_52] : memref<3x64x64xbf16, #tpu.memory_space<vmem>>, vector<1x64x64xbf16>
    %127 = vector.shape_cast %126 : vector<1x64x64xbf16> to vector<64x64xbf16>
    %cst_53 = arith.constant dense<0.000000e+00> : vector<8x64xf32>
    %128 = tpu.matmul %125, %127, %cst_53 {dimension_numbers = #tpu.dot_dimension_numbers<[1], [0], [0], [1], [0, 0, 1, 1], [], []>} : vector<8x64xbf16>, vector<64x64xbf16>, vector<8x64xf32> -> vector<8x64xf32>
    %129 = arith.addf %124, %128 : vector<8x64xf32>
    %130 = vector.broadcast %108 : vector<1x64xf32> to vector<8x64xf32>
    %131 = arith.mulf %129, %130 : vector<8x64xf32>
    %132 = vector.broadcast %109 : vector<1x64xf32> to vector<8x64xf32>
    %133 = arith.addf %131, %132 : vector<8x64xf32>
    %cst_54 = arith.constant 0.000000e+00 : f32
    %134 = vector.broadcast %cst_54 : f32 to vector<8x64xf32>
    %135 = arith.maximumf %133, %134 : vector<8x64xf32>
    %c2_55 = arith.constant 2 : index
    %c0_56 = arith.constant 0 : index
    %136 = vector.load %arg7[%c2_55, %c0_56] : memref<4x64xf32, #tpu.memory_space<vmem>>, vector<1x64xf32>
    %c3 = arith.constant 3 : index
    %c0_57 = arith.constant 0 : index
    %137 = vector.load %arg7[%c3, %c0_57] : memref<4x64xf32, #tpu.memory_space<vmem>>, vector<1x64xf32>
    %c1_i32_58 = arith.constant 1 : i32
    %138 = tpu.dynamic_rotate %135 by %c1_i32_58 dim 0 : vector<8x64xf32>, i32 -> vector<8x64xf32>
    %139 = vector.broadcast %103 : vector<8x1xf32> to vector<8x64xf32>
    %140 = arith.mulf %138, %139 : vector<8x64xf32>
    %c7_i32_59 = arith.constant 7 : i32
    %141 = tpu.dynamic_rotate %135 by %c7_i32_59 dim 0 : vector<8x64xf32>, i32 -> vector<8x64xf32>
    %142 = vector.broadcast %107 : vector<8x1xf32> to vector<8x64xf32>
    %143 = arith.mulf %141, %142 : vector<8x64xf32>
    %144 = arith.truncf %140 : vector<8x64xf32> to vector<8x64xbf16>
    %c0_60 = arith.constant 0 : index
    %c0_61 = arith.constant 0 : index
    %c0_62 = arith.constant 0 : index
    %145 = vector.load %arg6[%c0_60, %c0_61, %c0_62] : memref<3x64x64xbf16, #tpu.memory_space<vmem>>, vector<1x64x64xbf16>
    %146 = vector.shape_cast %145 : vector<1x64x64xbf16> to vector<64x64xbf16>
    %cst_63 = arith.constant dense<0.000000e+00> : vector<8x64xf32>
    %147 = tpu.matmul %144, %146, %cst_63 {dimension_numbers = #tpu.dot_dimension_numbers<[1], [0], [0], [1], [0, 0, 1, 1], [], []>} : vector<8x64xbf16>, vector<64x64xbf16>, vector<8x64xf32> -> vector<8x64xf32>
    %148 = arith.truncf %135 : vector<8x64xf32> to vector<8x64xbf16>
    %c1_64 = arith.constant 1 : index
    %c0_65 = arith.constant 0 : index
    %c0_66 = arith.constant 0 : index
    %149 = vector.load %arg6[%c1_64, %c0_65, %c0_66] : memref<3x64x64xbf16, #tpu.memory_space<vmem>>, vector<1x64x64xbf16>
    %150 = vector.shape_cast %149 : vector<1x64x64xbf16> to vector<64x64xbf16>
    %cst_67 = arith.constant dense<0.000000e+00> : vector<8x64xf32>
    %151 = tpu.matmul %148, %150, %cst_67 {dimension_numbers = #tpu.dot_dimension_numbers<[1], [0], [0], [1], [0, 0, 1, 1], [], []>} : vector<8x64xbf16>, vector<64x64xbf16>, vector<8x64xf32> -> vector<8x64xf32>
    %152 = arith.addf %147, %151 : vector<8x64xf32>
    %153 = arith.truncf %143 : vector<8x64xf32> to vector<8x64xbf16>
    %c2_68 = arith.constant 2 : index
    %c0_69 = arith.constant 0 : index
    %c0_70 = arith.constant 0 : index
    %154 = vector.load %arg6[%c2_68, %c0_69, %c0_70] : memref<3x64x64xbf16, #tpu.memory_space<vmem>>, vector<1x64x64xbf16>
    %155 = vector.shape_cast %154 : vector<1x64x64xbf16> to vector<64x64xbf16>
    %cst_71 = arith.constant dense<0.000000e+00> : vector<8x64xf32>
    %156 = tpu.matmul %153, %155, %cst_71 {dimension_numbers = #tpu.dot_dimension_numbers<[1], [0], [0], [1], [0, 0, 1, 1], [], []>} : vector<8x64xbf16>, vector<64x64xbf16>, vector<8x64xf32> -> vector<8x64xf32>
    %157 = arith.addf %152, %156 : vector<8x64xf32>
    %158 = vector.broadcast %136 : vector<1x64xf32> to vector<8x64xf32>
    %159 = arith.mulf %157, %158 : vector<8x64xf32>
    %160 = vector.broadcast %137 : vector<1x64xf32> to vector<8x64xf32>
    %161 = arith.addf %159, %160 : vector<8x64xf32>
    %162 = arith.addf %161, %82 : vector<8x64xf32>
    %cst_72 = arith.constant 0.000000e+00 : f32
    %163 = vector.broadcast %cst_72 : f32 to vector<8x64xf32>
    %164 = arith.maximumf %162, %163 : vector<8x64xf32>
    %165 = vector.shape_cast %164 : vector<8x64xf32> to vector<1x8x64xf32>
    %c0_73 = arith.constant 0 : index
    %c0_74 = arith.constant 0 : index
    %c0_75 = arith.constant 0 : index
    %166 = vector.load %arg8[%c0_73, %c0_74, %c0_75] : memref<1x8x64xf32, #tpu.memory_space<vmem>>, vector<1x8x64xf32>
    tpu.vector_store %arg8[%c0_73, %c0_74, %c0_75], %165 {strides = array<i32>} : memref<1x8x64xf32, #tpu.memory_space<vmem>>, vector<1x8x64xf32>,
    return
  }
  func.func @transform_0(%arg0: i32) -> (i32, i32, i32) {
    %c0_i32 = arith.constant 0 : i32
    %c0_i32_0 = arith.constant 0 : i32
    %c0_i32_1 = arith.constant 0 : i32
    return %arg0, %c0_i32, %c0_i32_0 : i32, i32, i32
  }
  func.func @transform_1(%arg0: i32) -> (i32, i32, i32) {
    %c0_i32 = arith.constant 0 : i32
    %c0_i32_0 = arith.constant 0 : i32
    %c0_i32_1 = arith.constant 0 : i32
    return %arg0, %c0_i32, %c0_i32_0 : i32, i32, i32
  }
  func.func @transform_2(%arg0: i32) -> (i32, i32, i32, i32) {
    %c0_i32 = arith.constant 0 : i32
    %c0_i32_0 = arith.constant 0 : i32
    %c0_i32_1 = arith.constant 0 : i32
    %c0_i32_2 = arith.constant 0 : i32
    return %c0_i32, %arg0, %c0_i32_0, %c0_i32_1 : i32, i32, i32, i32
  }
  func.func @transform_3(%arg0: i32) -> (i32, i32) {
    %c0_i32 = arith.constant 0 : i32
    %c0_i32_0 = arith.constant 0 : i32
    %c0_i32_1 = arith.constant 0 : i32
    return %c0_i32, %c0_i32_0 : i32, i32
  }
  func.func @transform_4(%arg0: i32) -> (i32, i32, i32) {
    %c0_i32 = arith.constant 0 : i32
    %c0_i32_0 = arith.constant 0 : i32
    %c0_i32_1 = arith.constant 0 : i32
    %c0_i32_2 = arith.constant 0 : i32
    return %c0_i32, %c0_i32_0, %c0_i32_1 : i32, i32, i32
  }
  func.func @transform_5(%arg0: i32) -> (i32, i32, i32) {
    %c0_i32 = arith.constant 0 : i32
    %c0_i32_0 = arith.constant 0 : i32
    %c0_i32_1 = arith.constant 0 : i32
    %c0_i32_2 = arith.constant 0 : i32
    return %c0_i32, %c0_i32_0, %c0_i32_1 : i32, i32, i32
  }
  func.func @transform_6(%arg0: i32) -> (i32, i32) {
    %c0_i32 = arith.constant 0 : i32
    %c0_i32_0 = arith.constant 0 : i32
    %c0_i32_1 = arith.constant 0 : i32
    return %c0_i32, %c0_i32_0 : i32, i32
  }
  func.func @transform_7(%arg0: i32) -> (i32, i32, i32) {
    %c0_i32 = arith.constant 0 : i32
    %c0_i32_0 = arith.constant 0 : i32
    %c0_i32_1 = arith.constant 0 : i32
    return %arg0, %c0_i32, %c0_i32_0 : i32, i32, i32
  }
}

</mosaic_0001>

<llo_original>
// kernel: tpu_custom_call.1
$region0: #{tpu_custom_call.1}
  #allocation0 [shape = 'u32[]', space=smem, size = 0x4, offset = 0x4, fixed_abs, tag = 'smem constant byte address 0x4 - core index']
  #allocation1 [shape = 'u32[144,128]{1,0:T(1,128)}', space=vmem, size = 0x12000, scoped, tag = 'internal scratch']
  #allocation2 [shape = 'f32[8,64]{1,0:T(8,128)}', space=vmem, size = 0x1000, scoped, tag = 'scratch operand']
  %s0 = inlined_call_operand.hbm [shape: bf16[2,8,16], index: 0, kind: input, shape index: {}]
  %s1 = inlined_call_operand.hbm [shape: bf16[2,8,8], index: 1, kind: input, shape index: {}]
  %s2 = inlined_call_operand.hbm [shape: bf16[2,2,8,8], index: 2, kind: input, shape index: {}]
  %s3 = inlined_call_operand.vmem [shape: bf16[16,68], index: 3, kind: input, shape index: {}]
  %s4 = inlined_call_operand.hbm [shape: bf16[3,64,64], index: 4, kind: input, shape index: {}]
  %s5 = inlined_call_operand.hbm [shape: bf16[3,64,64], index: 5, kind: input, shape index: {}]
  %s6 = inlined_call_operand.vmem [shape: f32[4,64], index: 6, kind: input, shape index: {}]
  %s7 = inlined_call_operand.hbm [shape: f32[2,8,64], index: 7, kind: output, shape index: {}]
  %s8 = sld [smem:[#allocation0]]
  $region81: #{tpu_custom_call.1} parent=0
    _
  %s10 = ssub.s32 1, %s8
  %s11 = scalar_select 0, %s10, %s8
  $region1: #{tpu_custom_call.1} parent=0
    #allocation3 [shape = 'u8[4096]{0}', space=vmem, size = 0x1000, scoped, tag = 'input window, operand 0']
    #allocation4 [shape = 's32[2]{0}', space=sflag, size = 0x8, scoped, tag = 'scoped memory for tpu_custom_call.1']
    #allocation5 [shape = 's32[2]{0}', space=sflag, size = 0x8, scoped, tag = 'scoped memory for tpu_custom_call.1']
    #allocation6 [shape = 'u8[4096]{0}', space=vmem, size = 0x1000, scoped, tag = 'input window, operand 1']
    #allocation7 [shape = 's32[2]{0}', space=sflag, size = 0x8, scoped, tag = 'scoped memory for tpu_custom_call.1']
    #allocation8 [shape = 'u8[8192]{0}', space=vmem, size = 0x2000, scoped, tag = 'input window, operand 2']
    #allocation9 [shape = 'u8[49152]{0}', space=vmem, size = 0xc000, scoped, tag = 'input window, operand 4, single buffered']
    #allocation10 [shape = 's32[1]{0}', space=sflag, size = 0x4, scoped, tag = 'scoped memory for tpu_custom_call.1']
    #allocation11 [shape = 'u8[49152]{0}', space=vmem, size = 0xc000, scoped, tag = 'input window, operand 5, single buffered']
    #allocation12 [shape = 'u8[8192]{0}', space=vmem, size = 0x2000, scoped, tag = 'output window, operand 0']
    %12 = vsyncpa [#allocation4], 0
    %s13 = scalar_lea.sflag [#allocation4], 1
    %14 = vsyncpa %s13, 0
    %15 = vsyncpa [#allocation7], 0
    %s16 = scalar_lea.sflag [#allocation7], 1
    %17 = vsyncpa %s16, 0
    %18 = vsyncpa [#allocation10], 0
    %19 = vsyncpa [#allocation5], 0
    %s20 = scalar_lea.sflag [#allocation5], 1
    %21 = vsyncpa %s20, 0
    loop: start=0, step=1, limit=4
    $region2: #{tpu_custom_call.1} parent=1 // loop_pre_header
      _
    $region3: #{tpu_custom_call.1} parent=1 // loop_header
      %s23 = sphi 0, %s27
      %p24 = scmp.ge.s32.totalorder %s23, 4
      %s33 = sphi 0, %s35
      %s36 = sphi 0, %s33
      %s37 = sphi 0, %s36
      %s53 = sphi 0, %s37
      %s59 = sphi 0, %s61
      %s62 = sphi 0, %s59
      %s63 = sphi 0, %s62
      %s79 = sphi 0, %s63
      %s85 = sphi 0, %s87
      %s88 = sphi 0, %s85
      %s89 = sphi 0, %s88
      %s105 = sphi 0, %s89
      %s109 = sphi 0, %s109
      %s111 = sphi 0, %s109
      %s112 = sphi 0, %s111
      %s126 = sphi 0, %s112
      %s130 = sphi 0, %s130
      %s132 = sphi 0, %s130
      %s133 = sphi 0, %s132
      %s147 = sphi 0, %s133
      %s151 = sphi 0, %s151
      %s153 = sphi 0, %s151
      %s154 = sphi 0, %s153
      %s168 = sphi 0, %s154
      %s172 = sphi 0, %s172
      %s174 = sphi 0, %s172
      %s175 = sphi 0, %s174
      %s189 = sphi 0, %s175
      %s195 = sphi 0, %s197
      %s198 = sphi 0, %s195
      %s199 = sphi 0, %s198
      %s215 = sphi 0, %s199
    $region4: #{tpu_custom_call.1} parent=1 // loop_header_branch
      %26 = sbr.rel (%p24) target = $region8
    $region5: #{tpu_custom_call.1} parent=1 // loop_body
      %s28 = ssub.s32 %s23, 1
      %s29 = ssub.s32 %s23, 2
      %s30 = sadd.s32 %s23, 1
      %s31 = ssub.s32 %s23, %s30
      %p32 = scmp.eq.s32.totalorder %s31, 0
      %s34 = sadd.s32 %s33, 1
      %s35 = scalar_select %p32, %s33, %s34
      %p38 = pneg %p32
      %p39 = scmp.eq.s32.totalorder %s23, 1
      %p40 = por %p38, %p39
      %p41 = scmp.ne.s32.totalorder %s33, %s36
      %p42 = scmp.eq.s32.totalorder %s23, 0
      %p43 = por %p41, %p42
      %p44 = scmp.ne.s32.totalorder %s33, %s36
      %p45 = scmp.eq.s32.totalorder %s28, 1
      %p46 = por %p44, %p45
      %p47 = scmp.ne.s32.totalorder %s36, %s37
      %p48 = scmp.eq.s32.totalorder %s28, 0
      %p49 = por %p47, %p48
      %p50 = scmp.ne.s32.totalorder %s36, %s37
      %p51 = scmp.eq.s32.totalorder %s29, 1
      %p52 = por %p50, %p51
      %p54 = scmp.ne.s32.totalorder %s37, %s53
      %p55 = scmp.eq.s32.totalorder %s29, 0
      %p56 = por %p54, %p55
      %s57 = ssub.s32 %s23, %s30
      %p58 = scmp.eq.s32.totalorder %s57, 0
      %s60 = sadd.s32 %s59, 1
      %s61 = scalar_select %p58, %s59, %s60
      %p64 = pneg %p58
      %p65 = scmp.eq.s32.totalorder %s23, 1
      %p66 = por %p64, %p65
      %p67 = scmp.ne.s32.totalorder %s59, %s62
      %p68 = scmp.eq.s32.totalorder %s23, 0
      %p69 = por %p67, %p68
      %p70 = scmp.ne.s32.totalorder %s59, %s62
      %p71 = scmp.eq.s32.totalorder %s28, 1
      %p72 = por %p70, %p71
      %p73 = scmp.ne.s32.totalorder %s62, %s63
      %p74 = scmp.eq.s32.totalorder %s28, 0
      %p75 = por %p73, %p74
      %p76 = scmp.ne.s32.totalorder %s62, %s63
      %p77 = scmp.eq.s32.totalorder %s29, 1
      %p78 = por %p76, %p77
      %p80 = scmp.ne.s32.totalorder %s63, %s79
      %p81 = scmp.eq.s32.totalorder %s29, 0
      %p82 = por %p80, %p81
      %s83 = ssub.s32 %s23, %s30
      %p84 = scmp.eq.s32.totalorder %s83, 0
      %s86 = sadd.s32 %s85, 1
      %s87 = scalar_select %p84, %s85, %s86
      %p90 = pneg %p84
      %p91 = scmp.eq.s32.totalorder %s23, 1
      %p92 = por %p90, %p91
      %p93 = scmp.ne.s32.totalorder %s85, %s88
      %p94 = scmp.eq.s32.totalorder %s23, 0
      %p95 = por %p93, %p94
      %p96 = scmp.ne.s32.totalorder %s85, %s88
      %p97 = scmp.eq.s32.totalorder %s28, 1
      %p98 = por %p96, %p97
      %p99 = scmp.ne.s32.totalorder %s88, %s89
      %p100 = scmp.eq.s32.totalorder %s28, 0
      %p101 = por %p99, %p100
      %p102 = scmp.ne.s32.totalorder %s88, %s89
      %p103 = scmp.eq.s32.totalorder %s29, 1
      %p104 = por %p102, %p103
      %p106 = scmp.ne.s32.totalorder %s89, %s105
      %p107 = scmp.eq.s32.totalorder %s29, 0
      %p108 = por %p106, %p107
      %s110 = sadd.s32 %s109, 1
      %p113 = scmp.eq.s32.totalorder %s23, 1
      %p114 = scmp.ne.s32.totalorder %s109, %s111
      %p115 = scmp.eq.s32.totalorder %s23, 0
      %p116 = por %p114, %p115
      %p117 = scmp.ne.s32.totalorder %s109, %s111
      %p118 = scmp.eq.s32.totalorder %s28, 1
      %p119 = por %p117, %p118
      %p120 = scmp.ne.s32.totalorder %s111, %s112
      %p121 = scmp.eq.s32.totalorder %s28, 0
      %p122 = por %p120, %p121
      %p123 = scmp.ne.s32.totalorder %s111, %s112
      %p124 = scmp.eq.s32.totalorder %s29, 1
      %p125 = por %p123, %p124
      %p127 = scmp.ne.s32.totalorder %s112, %s126
      %p128 = scmp.eq.s32.totalorder %s29, 0
      %p129 = por %p127, %p128
      %s131 = sadd.s32 %s130, 1
      %p134 = scmp.eq.s32.totalorder %s23, 1
      %p135 = scmp.ne.s32.totalorder %s130, %s132
      %p136 = scmp.eq.s32.totalorder %s23, 0
      %p137 = por %p135, %p136
      %p138 = scmp.ne.s32.totalorder %s130, %s132
      %p139 = scmp.eq.s32.totalorder %s28, 1
      %p140 = por %p138, %p139
      %p141 = scmp.ne.s32.totalorder %s132, %s133
      %p142 = scmp.eq.s32.totalorder %s28, 0
      %p143 = por %p141, %p142
      %p144 = scmp.ne.s32.totalorder %s132, %s133
      %p145 = scmp.eq.s32.totalorder %s29, 1
      %p146 = por %p144, %p145
      %p148 = scmp.ne.s32.totalorder %s133, %s147
      %p149 = scmp.eq.s32.totalorder %s29, 0
      %p150 = por %p148, %p149
      %s152 = sadd.s32 %s151, 1
      %p155 = scmp.eq.s32.totalorder %s23, 1
      %p156 = scmp.ne.s32.totalorder %s151, %s153
      %p157 = scmp.eq.s32.totalorder %s23, 0
      %p158 = por %p156, %p157
      %p159 = scmp.ne.s32.totalorder %s151, %s153
      %p160 = scmp.eq.s32.totalorder %s28, 1
      %p161 = por %p159, %p160
      %p162 = scmp.ne.s32.totalorder %s153, %s154
      %p163 = scmp.eq.s32.totalorder %s28, 0
      %p164 = por %p162, %p163
      %p165 = scmp.ne.s32.totalorder %s153, %s154
      %p166 = scmp.eq.s32.totalorder %s29, 1
      %p167 = por %p165, %p166
      %p169 = scmp.ne.s32.totalorder %s154, %s168
      %p170 = scmp.eq.s32.totalorder %s29, 0
      %p171 = por %p169, %p170
      %s173 = sadd.s32 %s172, 1
      %p176 = scmp.eq.s32.totalorder %s23, 1
      %p177 = scmp.ne.s32.totalorder %s172, %s174
      %p178 = scmp.eq.s32.totalorder %s23, 0
      %p179 = por %p177, %p178
      %p180 = scmp.ne.s32.totalorder %s172, %s174
      %p181 = scmp.eq.s32.totalorder %s28, 1
      %p182 = por %p180, %p181
      %p183 = scmp.ne.s32.totalorder %s174, %s175
      %p184 = scmp.eq.s32.totalorder %s28, 0
      %p185 = por %p183, %p184
      %p186 = scmp.ne.s32.totalorder %s174, %s175
      %p187 = scmp.eq.s32.totalorder %s29, 1
      %p188 = por %p186, %p187
      %p190 = scmp.ne.s32.totalorder %s175, %s189
      %p191 = scmp.eq.s32.totalorder %s29, 0
      %p192 = por %p190, %p191
      %s193 = ssub.s32 %s23, %s30
      %p194 = scmp.eq.s32.totalorder %s193, 0
      %s196 = sadd.s32 %s195, 1
      %s197 = scalar_select %p194, %s195, %s196
      %p200 = pneg %p194
      %p201 = scmp.eq.s32.totalorder %s23, 1
      %p202 = por %p200, %p201
      %p203 = scmp.ne.s32.totalorder %s195, %s198
      %p204 = scmp.eq.s32.totalorder %s23, 0
      %p205 = por %p203, %p204
      %p206 = scmp.ne.s32.totalorder %s195, %s198
      %p207 = scmp.eq.s32.totalorder %s28, 1
      %p208 = por %p206, %p207
      %p209 = scmp.ne.s32.totalorder %s198, %s199
      %p210 = scmp.eq.s32.totalorder %s28, 0
      %p211 = por %p209, %p210
      %p212 = scmp.ne.s32.totalorder %s198, %s199
      %p213 = scmp.eq.s32.totalorder %s29, 1
      %p214 = por %p212, %p213
      %p216 = scmp.ne.s32.totalorder %s199, %s215
      %p217 = scmp.eq.s32.totalorder %s29, 0
      %p218 = por %p216, %p217
      %p219 = scmp.le.s32.totalorder 1, %s23
      %p220 = scmp.lt.s32.totalorder %s23, 3
      %p221 = pnand %p219, %p220
      %p222 = pneg %p221
      // Predicated region
      $region9: #{tpu_custom_call.1} parent=5 // pred_check
        _
      $region10: #{tpu_custom_call.1} parent=5 // pred_check_branch
        %224 = sbr.rel (%p221) target = $region12
      $region11: #{tpu_custom_call.1} parent=5 // pred_region
        %s225 = ssub.s32 %s23, 1
        // Predicated region
        $region13: #{tpu_custom_call.1} parent=11 // pred_check
          %p226 = pneg %p122
        $region14: #{tpu_custom_call.1} parent=11 // pred_check_branch
          %228 = sbr.rel (%p226) target = $region16
        $region15: #{tpu_custom_call.1} parent=11 // pred_region
          _
        $region16: #{tpu_custom_call.1} parent=11 // pred_fallthru
          _
        // Predicated region
        $region17: #{tpu_custom_call.1} parent=11 // pred_check
          %p229 = pneg %p143
        $region18: #{tpu_custom_call.1} parent=11 // pred_check_branch
          %231 = sbr.rel (%p229) target = $region20
        $region19: #{tpu_custom_call.1} parent=11 // pred_region
          %s233 = ssub.s32 1536, 1536
          %234 = vsyncadd [#allocation10], %s233
          %s235 = sshll.u32 [#allocation9], 4
          %s236 = int_to_ptr.vmem [resolvable:$true] %s235
          %241 = dma.hbm_to_vmem [thread:$0]  %s4, 1536, %s236, [#allocation10], 64, 64, 4
        $region20: #{tpu_custom_call.1} parent=11 // pred_fallthru
          _
        // Predicated region
        $region21: #{tpu_custom_call.1} parent=11 // pred_check
          %p242 = pneg %p164
        $region22: #{tpu_custom_call.1} parent=11 // pred_check_branch
          %244 = sbr.rel (%p242) target = $region24
        $region23: #{tpu_custom_call.1} parent=11 // pred_region
          %s246 = ssub.s32 1536, 1536
          %247 = vsyncadd [#allocation10], %s246
          %s248 = sshll.u32 [#allocation11], 4
          %s249 = int_to_ptr.vmem [resolvable:$true] %s248
          %254 = dma.hbm_to_vmem [thread:$0]  %s5, 1536, %s249, [#allocation10], 64, 64, 4
        $region24: #{tpu_custom_call.1} parent=11 // pred_fallthru
          _
        // Predicated region
        $region25: #{tpu_custom_call.1} parent=11 // pred_check
          %p255 = pneg %p185
        $region26: #{tpu_custom_call.1} parent=11 // pred_check_branch
          %257 = sbr.rel (%p255) target = $region28
        $region27: #{tpu_custom_call.1} parent=11 // pred_region
          _
        $region28: #{tpu_custom_call.1} parent=11 // pred_fallthru
          _
      $region12: #{tpu_custom_call.1} parent=5 // pred_fallthru
        _
      %p258 = scmp.lt.s32.totalorder %s23, 2
      // Predicated region
      $region29: #{tpu_custom_call.1} parent=5 // pred_check
        %p259 = pneg %p258
      $region30: #{tpu_custom_call.1} parent=5 // pred_check_branch
        %261 = sbr.rel (%p259) target = $region32
      $region31: #{tpu_custom_call.1} parent=5 // pred_region
        // Predicated region
        $region33: #{tpu_custom_call.1} parent=31 // pred_check
          %p262 = pneg %p43
        $region34: #{tpu_custom_call.1} parent=31 // pred_check_branch
          %264 = sbr.rel (%p262) target = $region36
        $region35: #{tpu_custom_call.1} parent=31 // pred_region
          %s265 = sand.u32 %s33, 1
          %s266 = scalar_lea.sflag [#allocation4], %s265
          %s267 = sand.u32 %s33, 1
          %s268 = smul.addr %s267, 4
          %s269 = scalar_lea.vmem [#allocation3], %s268
          %s271 = ssub.s32 64, 64
          %272 = vsyncadd %s266, %s271
          %s273 = smul.addr %s23, 64
          %s274 = scalar_lea.hbm %s0, %s273
          %s276 = sshll.u32 %s269, 4
          %s277 = int_to_ptr.vmem [resolvable:$true] %s276
          %279 = dma.hbm_to_vmem [thread:$0]  %s274, 64, %s277, %s266
        $region36: #{tpu_custom_call.1} parent=31 // pred_fallthru
          _
        // Predicated region
        $region37: #{tpu_custom_call.1} parent=31 // pred_check
          %p280 = pneg %p69
        $region38: #{tpu_custom_call.1} parent=31 // pred_check_branch
          %282 = sbr.rel (%p280) target = $region40
        $region39: #{tpu_custom_call.1} parent=31 // pred_region
          %s283 = sand.u32 %s23, 1
          %s284 = scalar_lea.sflag [#allocation7], %s283
          %s285 = sand.u32 %s59, 1
          %s286 = smul.addr %s285, 4
          %s287 = scalar_lea.vmem [#allocation6], %s286
          %s289 = ssub.s32 64, 64
          %290 = vsyncadd %s284, %s289
          %s291 = smul.addr %s23, 64
          %s292 = scalar_lea.hbm %s1, %s291
          %s294 = sshll.u32 %s287, 4
          %s295 = int_to_ptr.vmem [resolvable:$true] %s294
          %297 = dma.hbm_to_vmem [thread:$0]  %s292, 64, %s295, %s284
        $region40: #{tpu_custom_call.1} parent=31 // pred_fallthru
          _
        // Predicated region
        $region41: #{tpu_custom_call.1} parent=31 // pred_check
          %p298 = pneg %p95
        $region42: #{tpu_custom_call.1} parent=31 // pred_check_branch
          %300 = sbr.rel (%p298) target = $region44
        $region43: #{tpu_custom_call.1} parent=31 // pred_region
          %s301 = sand.u32 %s23, 1
          %s302 = scalar_lea.sflag [#allocation7], %s301
          %s303 = sand.u32 %s85, 1
          %s304 = smul.addr %s303, 8
          %s305 = scalar_lea.vmem [#allocation8], %s304
          %s307 = ssub.s32 128, 128
          %308 = vsyncadd %s302, %s307
          %s309 = smul.addr %s23, 64
          %s310 = scalar_lea.hbm %s2, %s309
          %s311 = sshll.u32 %s305, 4
          %s312 = int_to_ptr.vmem [resolvable:$true] %s311
          %317 = dma.hbm_to_vmem [thread:$0]  %s310, 128, %s312, %s302, 128, 64, 4
        $region44: #{tpu_custom_call.1} parent=31 // pred_fallthru
          _
      $region32: #{tpu_custom_call.1} parent=5 // pred_fallthru
        _
      %p318 = scmp.le.s32.totalorder 1, %s23
      %p319 = scmp.lt.s32.totalorder %s23, 3
      %p320 = pnand %p318, %p319
      %p321 = pneg %p320
      // Predicated region
      $region45: #{tpu_custom_call.1} parent=5 // pred_check
        _
      $region46: #{tpu_custom_call.1} parent=5 // pred_check_branch
        %323 = sbr.rel (%p320) target = $region48
      $region47: #{tpu_custom_call.1} parent=5 // pred_region
        %s324 = ssub.s32 %s23, 1
        %s325 = sand.u32 %s36, 1
        %s326 = scalar_lea.sflag [#allocation4], %s325
        %s327 = sand.u32 %s36, 1
        %s328 = smul.addr %s327, 4
        %s329 = scalar_lea.vmem [#allocation3], %s328
        // Predicated region
        $region49: #{tpu_custom_call.1} parent=47 // pred_check
          %p330 = pneg %p49
        $region50: #{tpu_custom_call.1} parent=47 // pred_check_branch
          %332 = sbr.rel (%p330) target = $region52
        $region51: #{tpu_custom_call.1} parent=47 // pred_region
          %333 = dma.done %s326, 64
        $region52: #{tpu_custom_call.1} parent=47 // pred_fallthru
          _
        %s334 = sand.u32 %s28, 1
        %s335 = scalar_lea.sflag [#allocation7], %s334
        %s336 = sand.u32 %s62, 1
        %s337 = smul.addr %s336, 4
        %s338 = scalar_lea.vmem [#allocation6], %s337
        // Predicated region
        $region53: #{tpu_custom_call.1} parent=47 // pred_check
          %p339 = pneg %p75
        $region54: #{tpu_custom_call.1} parent=47 // pred_check_branch
          %341 = sbr.rel (%p339) target = $region56
        $region55: #{tpu_custom_call.1} parent=47 // pred_region
          %342 = dma.done %s335, 64
        $region56: #{tpu_custom_call.1} parent=47 // pred_fallthru
          _
        %s343 = sand.u32 %s28, 1
        %s344 = scalar_lea.sflag [#allocation7], %s343
        %s345 = sand.u32 %s88, 1
        %s346 = smul.addr %s345, 8
        %s347 = scalar_lea.vmem [#allocation8], %s346
        // Predicated region
        $region57: #{tpu_custom_call.1} parent=47 // pred_check
          %p348 = pneg %p101
        $region58: #{tpu_custom_call.1} parent=47 // pred_check_branch
          %350 = sbr.rel (%p348) target = $region60
        $region59: #{tpu_custom_call.1} parent=47 // pred_region
          %351 = dma.done %s344, 128
        $region60: #{tpu_custom_call.1} parent=47 // pred_fallthru
          _
        // Predicated region
        $region61: #{tpu_custom_call.1} parent=47 // pred_check
          %p352 = pneg %p143
        $region62: #{tpu_custom_call.1} parent=47 // pred_check_branch
          %354 = sbr.rel (%p352) target = $region64
        $region63: #{tpu_custom_call.1} parent=47 // pred_region
          %355 = dma.done [#allocation10], 1536
        $region64: #{tpu_custom_call.1} parent=47 // pred_fallthru
          _
        // Predicated region
        $region65: #{tpu_custom_call.1} parent=47 // pred_check
          %p356 = pneg %p164
        $region66: #{tpu_custom_call.1} parent=47 // pred_check_branch
          %358 = sbr.rel (%p356) target = $region68
        $region67: #{tpu_custom_call.1} parent=47 // pred_region
          %359 = dma.done [#allocation10], 1536
        $region68: #{tpu_custom_call.1} parent=47 // pred_fallthru
          _
        %s360 = sand.u32 %s36, 1
        %s361 = scalar_lea.sflag [#allocation4], %s360
        %s362 = sand.u32 %s36, 1
        %s363 = smul.addr %s362, 4
        %s364 = scalar_lea.vmem [#allocation3], %s363
        %p365 = pneg %p49
        %p366 = pneg %p46
        %s367 = sand.u32 %s28, 1
        %s368 = scalar_lea.sflag [#allocation7], %s367
        %s369 = sand.u32 %s62, 1
        %s370 = smul.addr %s369, 4
        %s371 = scalar_lea.vmem [#allocation6], %s370
        %p372 = pneg %p75
        %p373 = pneg %p72
        %s374 = sand.u32 %s28, 1
        %s375 = scalar_lea.sflag [#allocation7], %s374
        %s376 = sand.u32 %s88, 1
        %s377 = smul.addr %s376, 8
        %s378 = scalar_lea.vmem [#allocation8], %s377
        %p379 = pneg %p101
        %p380 = pneg %p98
        %p381 = pneg %p122
        %p382 = pneg %p119
        %p383 = pneg %p143
        %p384 = pneg %p140
        %p385 = pneg %p164
        %p386 = pneg %p161
        %p387 = pneg %p185
        %p388 = pneg %p182
        %p389 = pneg %p211
        %p390 = pneg %p208
        %s391 = sand.u32 %s198, 1
        %s392 = scalar_lea.sflag [#allocation5], %s391
        %s393 = sand.u32 %s198, 1
        %s394 = smul.addr %s393, 8
        %s395 = scalar_lea.vmem [#allocation12], %s394
        %v397 = vld [vmem:[%s329] sm:$0xf]
        %v398 = vld [vmem:[%s3] sm:$0xf]
        %v399 = vld [vmem:[%s3 + $0x4] sm:$0xf]
        %v402 = vunpack.c.l.b16 %v398
        %v403 = vunpack.c.l.b16 %v399
        %v404 = vpack.c.b16 %v403, %v402
        %vm406 = vcmask 130048
        %v408 = vsel %vm406, %v397, 0
        %410 = vmatprep.subr.bf16.mxu0 0
        %411 = vmatpush1.bf16.msra.mxu0 %v404
        %412 = vmatprep.subr.bf16.mxu0 0
        %413 = vmatpush1.bf16.msra.mxu0 0
        %414 = vmatprep.subr.bf16.mxu0 0
        %415 = vmatpush1.bf16.msra.mxu0 0
        %416 = vmatprep.subr.bf16.mxu0 0
        %417 = vmatpush1.bf16.msra.mxu0 0
        %418 = vmatprep.subr.bf16.mxu0 0
        %419 = vmatpush1.bf16.msra.mxu0 0
        %420 = vmatprep.subr.bf16.mxu0 0
        %421 = vmatpush1.bf16.msra.mxu0 0
        %422 = vmatprep.subr.bf16.mxu0 0
        %423 = vmatpush1.bf16.msra.mxu0 0
        %424 = vmatprep.subr.bf16.mxu0 0
        %425 = vmatpush1.bf16.msra.mxu0 0
        %426 = vmatprep.subr.bf16.mxu0 0
        %427 = vmatpush1.bf16.msra.mxu0 0
        %428 = vmatprep.subr.bf16.mxu0 0
        %429 = vmatpush1.bf16.msra.mxu0 0
        %430 = vmatprep.subr.bf16.mxu0 0
        %431 = vmatpush1.bf16.msra.mxu0 0
        %432 = vmatprep.subr.bf16.mxu0 0
        %433 = vmatpush1.bf16.msra.mxu0 0
        %434 = vmatprep.subr.bf16.mxu0 0
        %435 = vmatpush1.bf16.msra.mxu0 0
        %436 = vmatprep.subr.bf16.mxu0 0
        %437 = vmatpush1.bf16.msra.mxu0 0
        %438 = vmatprep.subr.bf16.mxu0 0
        %439 = vmatpush1.bf16.msra.mxu0 0
        %440 = vmatprep.subr.bf16.mxu0 0
        %441 = vmatpush1.bf16.msra.mxu0 0
        %442 = vmatprep.mubr.bf16.mxu0 0
        %443 = vmatmul.mubr.bf16.gmra.mrb[0].mxu0 %v408
        %v444 = vpop.f32.mrb[0].mxu0
        %v445 = vadd.f32 0.0, %v444
        %v446 = vpop.f32.mrb[0].mxu0
        %v447 = vpop.f32.mrb[0].mxu0
        %v448 = vpop.f32.mrb[0].mxu0
        %449 = vdwg.mxu0
        %v450 = vld [vmem:[%s338] sm:$0xf]
        %v451 = vunpack.c.l.bf16 %v450
        %v452 = vld [vmem:[%s347] sm:$0xf]
        %v453 = vunpack.c.l.bf16 %v452
        %455 = vrot.lane.b32.xlu0 %v445, 62
        %v456 = vpop.permute.xlu0 %455
        %458 = vxpose.xlu0.b32.start [1/16] %v456, 128
        %459 = vxpose.xlu0.b32.cont [2/16] 0.0, 128
        %460 = vxpose.xlu0.b32.cont [3/16] 0.0, 128
        %461 = vxpose.xlu0.b32.cont [4/16] 0.0, 128
        %462 = vxpose.xlu0.b32.cont [5/16] 0.0, 128
        %463 = vxpose.xlu0.b32.cont [6/16] 0.0, 128
        %464 = vxpose.xlu0.b32.cont [7/16] 0.0, 128
        %465 = vxpose.xlu0.b32.cont [8/16] 0.0, 128
        %466 = vxpose.xlu0.b32.cont [9/16] 0.0, 128
        %467 = vxpose.xlu0.b32.cont [10/16] 0.0, 128
        %468 = vxpose.xlu0.b32.cont [11/16] 0.0, 128
        %469 = vxpose.xlu0.b32.cont [12/16] 0.0, 128
        %470 = vxpose.xlu0.b32.cont [13/16] 0.0, 128
        %471 = vxpose.xlu0.b32.cont [14/16] 0.0, 128
        %472 = vxpose.xlu0.b32.cont [15/16] 0.0, 128
        %473 = vxpose.xlu0.b32.end [16/16] 0.0, 128
        %v474 = vpop.trf.xlu0
        %v475 = vpop.trf.xlu0
        %v476 = vpop.trf.xlu0
        %v477 = vpop.trf.xlu0
        %v478 = vpop.trf.xlu0
        %v479 = vpop.trf.xlu0
        %v480 = vpop.trf.xlu0
        %v481 = vpop.trf.xlu0
        %v482 = vpop.trf.xlu0
        %v483 = vpop.trf.xlu0
        %v484 = vpop.trf.xlu0
        %v485 = vpop.trf.xlu0
        %v486 = vpop.trf.xlu0
        %v487 = vpop.trf.xlu0
        %v488 = vpop.trf.xlu0
        %v489 = vpop.trf.xlu0
        %490 = vset.pattern.permute.xlu0 64
        %491 = vperm.xlu0 %490, %v445
        %v492 = vpop.permute.xlu0 %491
        %v494 = vlaneseq
        %v495 = vshrl.u32 %v494, 7
        %v496 = vsub.s32 0, %v495
        %v497 = vrot.slane %v474, %v496
        %v498 = vadd.f32 %v492, %v497
        %v499 = vadd.f32 %v498, %v453
        %vm500 = vcmp.gt.f32.partialorder %v499, 0.0
        %v501 = vmul.f32 %v499, 0.2
        %v502 = vsel %vm500, %v499, %v501
        %vm503 = vcmp.gt.f32.partialorder %v451, 0.0
        %v504 = vsel %vm503, %v502, -9e+15
        %vm505 = vcmask 64512
        %v506 = vsel %vm505, %v504, -inf
        %507 = vmax.xlane.f32.xlu0 %v506
        %v508 = vpop.xlane.xlu0 %507
        %v509 = vsub.f32 %v504, %v508
        %v510 = vmul.f32 %v509, 1.442695
        %v511 = vpow.pop %v510
        %v512 = vsel %vm505, %v511, 0.0
        %513 = vadd.xlane.f32.xlu0 %v512
        %v514 = vpop.xlane.xlu0 %513
        %v515 = vrcp.pop %v514
        %v516 = vmul.f32 %v511, %v515
        %v517 = vpack.c.bf16 %v516, %v516
        %v518 = vpack.c.bf16 %v445, %v445
        %v520 = vsel %vm505, %v517, 0
        %vm522 = vcmask 1043456
        %v524 = vsel %vm522, %v518, 0
        %526 = vmatprep.subr.bf16.mxu0 0
        %527 = vmatpush1.bf16.msra.mxu0 %v524
        %528 = vmatprep.subr.bf16.mxu0 0
        %529 = vmatpush1.bf16.msra.mxu0 0
        %530 = vmatprep.subr.bf16.mxu0 0
        %531 = vmatpush1.bf16.msra.mxu0 0
        %532 = vmatprep.subr.bf16.mxu0 0
        %533 = vmatpush1.bf16.msra.mxu0 0
        %534 = vmatprep.subr.bf16.mxu0 0
        %535 = vmatpush1.bf16.msra.mxu0 0
        %536 = vmatprep.subr.bf16.mxu0 0
        %537 = vmatpush1.bf16.msra.mxu0 0
        %538 = vmatprep.subr.bf16.mxu0 0
        %539 = vmatpush1.bf16.msra.mxu0 0
        %540 = vmatprep.subr.bf16.mxu0 0
        %541 = vmatpush1.bf16.msra.mxu0 0
        %542 = vmatprep.subr.bf16.mxu0 0
        %543 = vmatpush1.bf16.msra.mxu0 0
        %544 = vmatprep.subr.bf16.mxu0 0
        %545 = vmatpush1.bf16.msra.mxu0 0
        %546 = vmatprep.subr.bf16.mxu0 0
        %547 = vmatpush1.bf16.msra.mxu0 0
        %548 = vmatprep.subr.bf16.mxu0 0
        %549 = vmatpush1.bf16.msra.mxu0 0
        %550 = vmatprep.subr.bf16.mxu0 0
        %551 = vmatpush1.bf16.msra.mxu0 0
        %552 = vmatprep.subr.bf16.mxu0 0
        %553 = vmatpush1.bf16.msra.mxu0 0
        %554 = vmatprep.subr.bf16.mxu0 0
        %555 = vmatpush1.bf16.msra.mxu0 0
        %556 = vmatprep.subr.bf16.mxu0 0
        %557 = vmatpush1.bf16.msra.mxu0 0
        %558 = vmatprep.mubr.bf16.mxu0 0
        %559 = vmatmul.mubr.bf16.gmra.mrb[0].mxu0 %v520
        %v560 = vpop.f32.mrb[0].mxu0
        %v561 = vadd.f32 0.0, %v560
        %v562 = vpop.f32.mrb[0].mxu0
        %v563 = vpop.f32.mrb[0].mxu0
        %v564 = vpop.f32.mrb[0].mxu0
        %565 = vdwg.mxu0
        %vm566 = vcmask 261120
        %567 = vst.msk [vmem:[#allocation2] sm:$0xff] %vm566, %v561
        %s568 = scalar_lea.vmem %s347, 4 [#allocation8]
        %v569 = vld [vmem:[%s568] sm:$0xf]
        %v570 = vunpack.c.l.bf16 %v569
        %571 = vrot.lane.b32.xlu0 %v445, 61
        %v572 = vpop.permute.xlu0 %571
        %574 = vxpose.xlu0.b32.start [1/16] %v572, 128
        %575 = vxpose.xlu0.b32.cont [2/16] 0.0, 128
        %576 = vxpose.xlu0.b32.cont [3/16] 0.0, 128
        %577 = vxpose.xlu0.b32.cont [4/16] 0.0, 128
        %578 = vxpose.xlu0.b32.cont [5/16] 0.0, 128
        %579 = vxpose.xlu0.b32.cont [6/16] 0.0, 128
        %580 = vxpose.xlu0.b32.cont [7/16] 0.0, 128
        %581 = vxpose.xlu0.b32.cont [8/16] 0.0, 128
        %582 = vxpose.xlu0.b32.cont [9/16] 0.0, 128
        %583 = vxpose.xlu0.b32.cont [10/16] 0.0, 128
        %584 = vxpose.xlu0.b32.cont [11/16] 0.0, 128
        %585 = vxpose.xlu0.b32.cont [12/16] 0.0, 128
        %586 = vxpose.xlu0.b32.cont [13/16] 0.0, 128
        %587 = vxpose.xlu0.b32.cont [14/16] 0.0, 128
        %588 = vxpose.xlu0.b32.cont [15/16] 0.0, 128
        %589 = vxpose.xlu0.b32.end [16/16] 0.0, 128
        %v590 = vpop.trf.xlu0
        %v591 = vpop.trf.xlu0
        %v592 = vpop.trf.xlu0
        %v593 = vpop.trf.xlu0
        %v594 = vpop.trf.xlu0
        %v595 = vpop.trf.xlu0
        %v596 = vpop.trf.xlu0
        %v597 = vpop.trf.xlu0
        %v598 = vpop.trf.xlu0
        %v599 = vpop.trf.xlu0
        %v600 = vpop.trf.xlu0
        %v601 = vpop.trf.xlu0
        %v602 = vpop.trf.xlu0
        %v603 = vpop.trf.xlu0
        %v604 = vpop.trf.xlu0
        %v605 = vpop.trf.xlu0
        %606 = vset.pattern.permute.xlu0 65
        %607 = vperm.xlu0 %606, %v445
        %v608 = vpop.permute.xlu0 %607
        %v610 = vlaneseq
        %v611 = vshrl.u32 %v610, 7
        %v612 = vsub.s32 0, %v611
        %v613 = vrot.slane %v590, %v612
        %v614 = vadd.f32 %v608, %v613
        %v615 = vadd.f32 %v614, %v570
        %vm616 = vcmp.gt.f32.partialorder %v615, 0.0
        %v617 = vmul.f32 %v615, 0.2
        %v618 = vsel %vm616, %v615, %v617
        %v619 = vsel %vm503, %v618, -9e+15
        %v620 = vsel %vm505, %v619, -inf
        %621 = vmax.xlane.f32.xlu0 %v620
        %v622 = vpop.xlane.xlu0 %621
        %v623 = vsub.f32 %v619, %v622
        %v624 = vmul.f32 %v623, 1.442695
        %v625 = vpow.pop %v624
        %v626 = vsel %vm505, %v625, 0.0
        %627 = vadd.xlane.f32.xlu0 %v626
        %v628 = vpop.xlane.xlu0 %627
        %v629 = vrcp.pop %v628
        %v630 = vmul.f32 %v625, %v629
        %v631 = vpack.c.bf16 %v630, %v630
        %633 = vrot.lane.b32.xlu0 %v518, 96
        %v634 = vpop.permute.xlu0 %633
        %v636 = vsel %vm505, %v631, 0
        %v639 = vsel %vm522, %v634, 0
        %641 = vmatprep.subr.bf16.mxu0 0
        %642 = vmatpush1.bf16.msra.mxu0 %v639
        %643 = vmatprep.subr.bf16.mxu0 0
        %644 = vmatpush1.bf16.msra.mxu0 0
        %645 = vmatprep.subr.bf16.mxu0 0
        %646 = vmatpush1.bf16.msra.mxu0 0
        %647 = vmatprep.subr.bf16.mxu0 0
        %648 = vmatpush1.bf16.msra.mxu0 0
        %649 = vmatprep.subr.bf16.mxu0 0
        %650 = vmatpush1.bf16.msra.mxu0 0
        %651 = vmatprep.subr.bf16.mxu0 0
        %652 = vmatpush1.bf16.msra.mxu0 0
        %653 = vmatprep.subr.bf16.mxu0 0
        %654 = vmatpush1.bf16.msra.mxu0 0
        %655 = vmatprep.subr.bf16.mxu0 0
        %656 = vmatpush1.bf16.msra.mxu0 0
        %657 = vmatprep.subr.bf16.mxu0 0
        %658 = vmatpush1.bf16.msra.mxu0 0
        %659 = vmatprep.subr.bf16.mxu0 0
        %660 = vmatpush1.bf16.msra.mxu0 0
        %661 = vmatprep.subr.bf16.mxu0 0
        %662 = vmatpush1.bf16.msra.mxu0 0
        %663 = vmatprep.subr.bf16.mxu0 0
        %664 = vmatpush1.bf16.msra.mxu0 0
        %665 = vmatprep.subr.bf16.mxu0 0
        %666 = vmatpush1.bf16.msra.mxu0 0
        %667 = vmatprep.subr.bf16.mxu0 0
        %668 = vmatpush1.bf16.msra.mxu0 0
        %669 = vmatprep.subr.bf16.mxu0 0
        %670 = vmatpush1.bf16.msra.mxu0 0
        %671 = vmatprep.subr.bf16.mxu0 0
        %672 = vmatpush1.bf16.msra.mxu0 0
        %673 = vmatprep.mubr.bf16.mxu0 0
        %674 = vmatmul.mubr.bf16.gmra.mrb[0].mxu0 %v636
        %v675 = vpop.f32.mrb[0].mxu0
        %v676 = vadd.f32 0.0, %v675
        %v677 = vpop.f32.mrb[0].mxu0
        %v678 = vpop.f32.mrb[0].mxu0
        %v679 = vpop.f32.mrb[0].mxu0
        %680 = vdwg.mxu0
        %682 = vrot.lane.b32.xlu0 %v676, 32
        %v683 = vpop.permute.xlu0 %682
        %vm685 = vcmask 523520
        %686 = vst.msk [vmem:[#allocation2] sm:$0xff] %vm685, %v683
        %v687 = vld [vmem:[#allocation2] sm:$0xff]
        %v688 = vlaneseq
        %v689 = vshrl.u32 %v688, 7
        %vm690 = vcmp.lt.s32.totalorder %v689, 0
        %v691 = vsub.s32 0, %v689
        %v692 = vsel %vm690, %v691, %v689
        %v693 = vshrl.u32 %v692, 3
        %v694 = vand.u32 %v692, 7
        %v695 = vsub.s32 0, %v694
        %v696 = vsel %vm690, %v695, %v694
        %vm697 = vcmp.ne.s32.totalorder %v696, 0
        %vm698 = vcmp.lt.s32.totalorder %v696, 0
        %vm699 = vmand %vm698, %vm697
        %v700 = vadd.s32 %v696, 8
        %v701 = vsel %vm699, %v700, %v696
        %vm702 = vcmp.ne.s32.totalorder %v701, 0
        %v703 = vsel %vm702, 1, 0
        %v704 = vcvt.s32.f32 %v703
        %vm705 = vcmp.ne.s32.totalorder %v701, 7
        %v706 = vsel %vm705, 1, 0
        %v707 = vcvt.s32.f32 %v706
        %v708 = vld [vmem:[%s6] sm:$0x1]
        %v709 = vld [vmem:[%s6 + $0x1] sm:$0x1]
        %v710 = vrot.slane %v687, 7
        %v711 = vmul.f32 %v710, %v704
        %v712 = vrot.slane %v687, 1
        %v713 = vmul.f32 %v712, %v707
        %v714 = vpack.c.bf16 %v711, %v711
        %v715 = vld [vmem:[#allocation9] sm:$0xf]
        %v716 = vld [vmem:[#allocation9 + $0x4] sm:$0xf]
        %v717 = vld [vmem:[#allocation9 + $0x8] sm:$0xf]
        %v718 = vld [vmem:[#allocation9 + $0xc] sm:$0xf]
        %v719 = vld [vmem:[#allocation9 + $0x10] sm:$0xf]
        %v720 = vld [vmem:[#allocation9 + $0x14] sm:$0xf]
        %v721 = vld [vmem:[#allocation9 + $0x18] sm:$0xf]
        %v722 = vld [vmem:[#allocation9 + $0x1c] sm:$0xf]
        %v723 = vpack.c.bf16 %v687, %v687
        %s724 = scalar_lea.vmem [#allocation9], 32
        %v725 = vld [vmem:[%s724] sm:$0xf]
        %v726 = vld [vmem:[%s724 + $0x4] sm:$0xf]
        %v727 = vld [vmem:[%s724 + $0x8] sm:$0xf]
        %v728 = vld [vmem:[%s724 + $0xc] sm:$0xf]
        %v729 = vld [vmem:[%s724 + $0x10] sm:$0xf]
        %v730 = vld [vmem:[%s724 + $0x14] sm:$0xf]
        %v731 = vld [vmem:[%s724 + $0x18] sm:$0xf]
        %v732 = vld [vmem:[%s724 + $0x1c] sm:$0xf]
        %v741 = vunpack.c.l.b16 %v725
        %v742 = vunpack.c.l.b16 %v726
        %v743 = vunpack.c.l.b16 %v727
        %v744 = vunpack.c.l.b16 %v728
        %v745 = vunpack.c.l.b16 %v729
        %v746 = vunpack.c.l.b16 %v730
        %v747 = vunpack.c.l.b16 %v731
        %v748 = vunpack.c.l.b16 %v732
        %v749 = vpack.c.b16 %v742, %v741
        %v750 = vpack.c.b16 %v744, %v743
        %v751 = vpack.c.b16 %v746, %v745
        %v752 = vpack.c.b16 %v748, %v747
        %vm757 = vcmask 523264
        %v759 = vsel %vm757, %v723, 0
        %761 = vmatprep.subr.bf16.mxu0 0
        %762 = vmatpush1.bf16.msra.mxu0 %v749
        %763 = vmatprep.subr.bf16.mxu0 0
        %764 = vmatpush1.bf16.msra.mxu0 %v750
        %765 = vmatprep.subr.bf16.mxu0 0
        %766 = vmatpush1.bf16.msra.mxu0 %v751
        %767 = vmatprep.subr.bf16.mxu0 0
        %768 = vmatpush1.bf16.msra.mxu0 %v752
        %769 = vmatprep.subr.bf16.mxu0 0
        %770 = vmatpush1.bf16.msra.mxu0 0
        %771 = vmatprep.subr.bf16.mxu0 0
        %772 = vmatpush1.bf16.msra.mxu0 0
        %773 = vmatprep.subr.bf16.mxu0 0
        %774 = vmatpush1.bf16.msra.mxu0 0
        %775 = vmatprep.subr.bf16.mxu0 0
        %776 = vmatpush1.bf16.msra.mxu0 0
        %777 = vmatprep.subr.bf16.mxu0 0
        %778 = vmatpush1.bf16.msra.mxu0 0
        %779 = vmatprep.subr.bf16.mxu0 0
        %780 = vmatpush1.bf16.msra.mxu0 0
        %781 = vmatprep.subr.bf16.mxu0 0
        %782 = vmatpush1.bf16.msra.mxu0 0
        %783 = vmatprep.subr.bf16.mxu0 0
        %784 = vmatpush1.bf16.msra.mxu0 0
        %785 = vmatprep.subr.bf16.mxu0 0
        %786 = vmatpush1.bf16.msra.mxu0 0
        %787 = vmatprep.subr.bf16.mxu0 0
        %788 = vmatpush1.bf16.msra.mxu0 0
        %789 = vmatprep.subr.bf16.mxu0 0
        %790 = vmatpush1.bf16.msra.mxu0 0
        %791 = vmatprep.subr.bf16.mxu0 0
        %792 = vmatpush1.bf16.msra.mxu0 0
        %793 = vmatprep.mubr.bf16.mxu0 0
        %794 = vmatmul.mubr.bf16.gmra.mrb[0].mxu0 %v759
        %v795 = vpop.f32.mrb[0].mxu0
        %v796 = vadd.f32 0.0, %v795
        %v797 = vpop.f32.mrb[0].mxu0
        %v798 = vpop.f32.mrb[0].mxu0
        %v799 = vpop.f32.mrb[0].mxu0
        %800 = vdwg.mxu0
        %v809 = vunpack.c.l.b16 %v715
        %v810 = vunpack.c.l.b16 %v716
        %v811 = vunpack.c.l.b16 %v717
        %v812 = vunpack.c.l.b16 %v718
        %v813 = vunpack.c.l.b16 %v719
        %v814 = vunpack.c.l.b16 %v720
        %v815 = vunpack.c.l.b16 %v721
        %v816 = vunpack.c.l.b16 %v722
        %v817 = vpack.c.b16 %v810, %v809
        %v818 = vpack.c.b16 %v812, %v811
        %v819 = vpack.c.b16 %v814, %v813
        %v820 = vpack.c.b16 %v816, %v815
        %v826 = vsel %vm757, %v714, 0
        %828 = vmatprep.subr.bf16.mxu0 0
        %829 = vmatpush1.bf16.msra.mxu0 %v817
        %830 = vmatprep.subr.bf16.mxu0 0
        %831 = vmatpush1.bf16.msra.mxu0 %v818
        %832 = vmatprep.subr.bf16.mxu0 0
        %833 = vmatpush1.bf16.msra.mxu0 %v819
        %834 = vmatprep.subr.bf16.mxu0 0
        %835 = vmatpush1.bf16.msra.mxu0 %v820
        %836 = vmatprep.subr.bf16.mxu0 0
        %837 = vmatpush1.bf16.msra.mxu0 0
        %838 = vmatprep.subr.bf16.mxu0 0
        %839 = vmatpush1.bf16.msra.mxu0 0
        %840 = vmatprep.subr.bf16.mxu0 0
        %841 = vmatpush1.bf16.msra.mxu0 0
        %842 = vmatprep.subr.bf16.mxu0 0
        %843 = vmatpush1.bf16.msra.mxu0 0
        %844 = vmatprep.subr.bf16.mxu0 0
        %845 = vmatpush1.bf16.msra.mxu0 0
        %846 = vmatprep.subr.bf16.mxu0 0
        %847 = vmatpush1.bf16.msra.mxu0 0
        %848 = vmatprep.subr.bf16.mxu0 0
        %849 = vmatpush1.bf16.msra.mxu0 0
        %850 = vmatprep.subr.bf16.mxu0 0
        %851 = vmatpush1.bf16.msra.mxu0 0
        %852 = vmatprep.subr.bf16.mxu0 0
        %853 = vmatpush1.bf16.msra.mxu0 0
        %854 = vmatprep.subr.bf16.mxu0 0
        %855 = vmatpush1.bf16.msra.mxu0 0
        %856 = vmatprep.subr.bf16.mxu0 0
        %857 = vmatpush1.bf16.msra.mxu0 0
        %858 = vmatprep.subr.bf16.mxu0 0
        %859 = vmatpush1.bf16.msra.mxu0 0
        %860 = vmatprep.mubr.bf16.mxu0 0
        %861 = vmatmul.mubr.bf16.gmra.mrb[0].mxu0 %v826
        %v862 = vpop.f32.mrb[0].mxu0
        %v863 = vadd.f32 %v796, %v862
        %v864 = vpop.f32.mrb[0].mxu0
        %v865 = vpop.f32.mrb[0].mxu0
        %v866 = vpop.f32.mrb[0].mxu0
        %867 = vdwg.mxu0
        %v868 = vpack.c.bf16 %v713, %v713
        %s869 = scalar_lea.vmem [#allocation9], 64
        %v870 = vld [vmem:[%s869] sm:$0xf]
        %v871 = vld [vmem:[%s869 + $0x4] sm:$0xf]
        %v872 = vld [vmem:[%s869 + $0x8] sm:$0xf]
        %v873 = vld [vmem:[%s869 + $0xc] sm:$0xf]
        %v874 = vld [vmem:[%s869 + $0x10] sm:$0xf]
        %v875 = vld [vmem:[%s869 + $0x14] sm:$0xf]
        %v876 = vld [vmem:[%s869 + $0x18] sm:$0xf]
        %v877 = vld [vmem:[%s869 + $0x1c] sm:$0xf]
        %v886 = vunpack.c.l.b16 %v870
        %v887 = vunpack.c.l.b16 %v871
        %v888 = vunpack.c.l.b16 %v872
        %v889 = vunpack.c.l.b16 %v873
        %v890 = vunpack.c.l.b16 %v874
        %v891 = vunpack.c.l.b16 %v875
        %v892 = vunpack.c.l.b16 %v876
        %v893 = vunpack.c.l.b16 %v877
        %v894 = vpack.c.b16 %v887, %v886
        %v895 = vpack.c.b16 %v889, %v888
        %v896 = vpack.c.b16 %v891, %v890
        %v897 = vpack.c.b16 %v893, %v892
        %v903 = vsel %vm757, %v868, 0
        %905 = vmatprep.subr.bf16.mxu0 0
        %906 = vmatpush1.bf16.msra.mxu0 %v894
        %907 = vmatprep.subr.bf16.mxu0 0
        %908 = vmatpush1.bf16.msra.mxu0 %v895
        %909 = vmatprep.subr.bf16.mxu0 0
        %910 = vmatpush1.bf16.msra.mxu0 %v896
        %911 = vmatprep.subr.bf16.mxu0 0
        %912 = vmatpush1.bf16.msra.mxu0 %v897
        %913 = vmatprep.subr.bf16.mxu0 0
        %914 = vmatpush1.bf16.msra.mxu0 0
        %915 = vmatprep.subr.bf16.mxu0 0
        %916 = vmatpush1.bf16.msra.mxu0 0
        %917 = vmatprep.subr.bf16.mxu0 0
        %918 = vmatpush1.bf16.msra.mxu0 0
        %919 = vmatprep.subr.bf16.mxu0 0
        %920 = vmatpush1.bf16.msra.mxu0 0
        %921 = vmatprep.subr.bf16.mxu0 0
        %922 = vmatpush1.bf16.msra.mxu0 0
        %923 = vmatprep.subr.bf16.mxu0 0
        %924 = vmatpush1.bf16.msra.mxu0 0
        %925 = vmatprep.subr.bf16.mxu0 0
        %926 = vmatpush1.bf16.msra.mxu0 0
        %927 = vmatprep.subr.bf16.mxu0 0
        %928 = vmatpush1.bf16.msra.mxu0 0
        %929 = vmatprep.subr.bf16.mxu0 0
        %930 = vmatpush1.bf16.msra.mxu0 0
        %931 = vmatprep.subr.bf16.mxu0 0
        %932 = vmatpush1.bf16.msra.mxu0 0
        %933 = vmatprep.subr.bf16.mxu0 0
        %934 = vmatpush1.bf16.msra.mxu0 0
        %935 = vmatprep.subr.bf16.mxu0 0
        %936 = vmatpush1.bf16.msra.mxu0 0
        %937 = vmatprep.mubr.bf16.mxu0 0
        %938 = vmatmul.mubr.bf16.gmra.mrb[0].mxu0 %v903
        %v939 = vpop.f32.mrb[0].mxu0
        %v940 = vadd.f32 0.0, %v939
        %v941 = vpop.f32.mrb[0].mxu0
        %v942 = vpop.f32.mrb[0].mxu0
        %v943 = vpop.f32.mrb[0].mxu0
        %944 = vdwg.mxu0
        %v945 = vadd.f32 %v863, %v940
        %v946 = vlaneseq
        %v947 = vshrl.u32 %v946, 7
        %v948 = vsub.s32 0, %v947
        %v949 = vrot.slane %v708, %v948
        %v950 = vmul.f32 %v945, %v949
        %v951 = vlaneseq
        %v952 = vshrl.u32 %v951, 7
        %v953 = vsub.s32 0, %v952
        %v954 = vrot.slane %v709, %v953
        %v955 = vadd.f32 %v950, %v954
        %v956 = vmax.f32 %v955, 0.0
        %v957 = vld [vmem:[%s6 + $0x2] sm:$0x1]
        %v958 = vld [vmem:[%s6 + $0x3] sm:$0x1]
        %v959 = vrot.slane %v956, 7
        %v960 = vmul.f32 %v959, %v704
        %v961 = vrot.slane %v956, 1
        %v962 = vmul.f32 %v961, %v707
        %v963 = vpack.c.bf16 %v960, %v960
        %v964 = vld [vmem:[#allocation11] sm:$0xf]
        %v965 = vld [vmem:[#allocation11 + $0x4] sm:$0xf]
        %v966 = vld [vmem:[#allocation11 + $0x8] sm:$0xf]
        %v967 = vld [vmem:[#allocation11 + $0xc] sm:$0xf]
        %v968 = vld [vmem:[#allocation11 + $0x10] sm:$0xf]
        %v969 = vld [vmem:[#allocation11 + $0x14] sm:$0xf]
        %v970 = vld [vmem:[#allocation11 + $0x18] sm:$0xf]
        %v971 = vld [vmem:[#allocation11 + $0x1c] sm:$0xf]
        %v972 = vpack.c.bf16 %v956, %v956
        %s973 = scalar_lea.vmem [#allocation11], 32
        %v974 = vld [vmem:[%s973] sm:$0xf]
        %v975 = vld [vmem:[%s973 + $0x4] sm:$0xf]
        %v976 = vld [vmem:[%s973 + $0x8] sm:$0xf]
        %v977 = vld [vmem:[%s973 + $0xc] sm:$0xf]
        %v978 = vld [vmem:[%s973 + $0x10] sm:$0xf]
        %v979 = vld [vmem:[%s973 + $0x14] sm:$0xf]
        %v980 = vld [vmem:[%s973 + $0x18] sm:$0xf]
        %v981 = vld [vmem:[%s973 + $0x1c] sm:$0xf]
        %v990 = vunpack.c.l.b16 %v974
        %v991 = vunpack.c.l.b16 %v975
        %v992 = vunpack.c.l.b16 %v976
        %v993 = vunpack.c.l.b16 %v977
        %v994 = vunpack.c.l.b16 %v978
        %v995 = vunpack.c.l.b16 %v979
        %v996 = vunpack.c.l.b16 %v980
        %v997 = vunpack.c.l.b16 %v981
        %v998 = vpack.c.b16 %v991, %v990
        %v999 = vpack.c.b16 %v993, %v992
        %v1000 = vpack.c.b16 %v995, %v994
        %v1001 = vpack.c.b16 %v997, %v996
        %v1007 = vsel %vm757, %v972, 0
        %1009 = vmatprep.subr.bf16.mxu0 0
        %1010 = vmatpush1.bf16.msra.mxu0 %v998
        %1011 = vmatprep.subr.bf16.mxu0 0
        %1012 = vmatpush1.bf16.msra.mxu0 %v999
        %1013 = vmatprep.subr.bf16.mxu0 0
        %1014 = vmatpush1.bf16.msra.mxu0 %v1000
        %1015 = vmatprep.subr.bf16.mxu0 0
        %1016 = vmatpush1.bf16.msra.mxu0 %v1001
        %1017 = vmatprep.subr.bf16.mxu0 0
        %1018 = vmatpush1.bf16.msra.mxu0 0
        %1019 = vmatprep.subr.bf16.mxu0 0
        %1020 = vmatpush1.bf16.msra.mxu0 0
        %1021 = vmatprep.subr.bf16.mxu0 0
        %1022 = vmatpush1.bf16.msra.mxu0 0
        %1023 = vmatprep.subr.bf16.mxu0 0
        %1024 = vmatpush1.bf16.msra.mxu0 0
        %1025 = vmatprep.subr.bf16.mxu0 0
        %1026 = vmatpush1.bf16.msra.mxu0 0
        %1027 = vmatprep.subr.bf16.mxu0 0
        %1028 = vmatpush1.bf16.msra.mxu0 0
        %1029 = vmatprep.subr.bf16.mxu0 0
        %1030 = vmatpush1.bf16.msra.mxu0 0
        %1031 = vmatprep.subr.bf16.mxu0 0
        %1032 = vmatpush1.bf16.msra.mxu0 0
        %1033 = vmatprep.subr.bf16.mxu0 0
        %1034 = vmatpush1.bf16.msra.mxu0 0
        %1035 = vmatprep.subr.bf16.mxu0 0
        %1036 = vmatpush1.bf16.msra.mxu0 0
        %1037 = vmatprep.subr.bf16.mxu0 0
        %1038 = vmatpush1.bf16.msra.mxu0 0
        %1039 = vmatprep.subr.bf16.mxu0 0
        %1040 = vmatpush1.bf16.msra.mxu0 0
        %1041 = vmatprep.mubr.bf16.mxu0 0
        %1042 = vmatmul.mubr.bf16.gmra.mrb[0].mxu0 %v1007
        %v1043 = vpop.f32.mrb[0].mxu0
        %v1044 = vadd.f32 0.0, %v1043
        %v1045 = vpop.f32.mrb[0].mxu0
        %v1046 = vpop.f32.mrb[0].mxu0
        %v1047 = vpop.f32.mrb[0].mxu0
        %1048 = vdwg.mxu0
        %v1057 = vunpack.c.l.b16 %v964
        %v1058 = vunpack.c.l.b16 %v965
        %v1059 = vunpack.c.l.b16 %v966
        %v1060 = vunpack.c.l.b16 %v967
        %v1061 = vunpack.c.l.b16 %v968
        %v1062 = vunpack.c.l.b16 %v969
        %v1063 = vunpack.c.l.b16 %v970
        %v1064 = vunpack.c.l.b16 %v971
        %v1065 = vpack.c.b16 %v1058, %v1057
        %v1066 = vpack.c.b16 %v1060, %v1059
        %v1067 = vpack.c.b16 %v1062, %v1061
        %v1068 = vpack.c.b16 %v1064, %v1063
        %v1074 = vsel %vm757, %v963, 0
        %1076 = vmatprep.subr.bf16.mxu0 0
        %1077 = vmatpush1.bf16.msra.mxu0 %v1065
        %1078 = vmatprep.subr.bf16.mxu0 0
        %1079 = vmatpush1.bf16.msra.mxu0 %v1066
        %1080 = vmatprep.subr.bf16.mxu0 0
        %1081 = vmatpush1.bf16.msra.mxu0 %v1067
        %1082 = vmatprep.subr.bf16.mxu0 0
        %1083 = vmatpush1.bf16.msra.mxu0 %v1068
        %1084 = vmatprep.subr.bf16.mxu0 0
        %1085 = vmatpush1.bf16.msra.mxu0 0
        %1086 = vmatprep.subr.bf16.mxu0 0
        %1087 = vmatpush1.bf16.msra.mxu0 0
        %1088 = vmatprep.subr.bf16.mxu0 0
        %1089 = vmatpush1.bf16.msra.mxu0 0
        %1090 = vmatprep.subr.bf16.mxu0 0
        %1091 = vmatpush1.bf16.msra.mxu0 0
        %1092 = vmatprep.subr.bf16.mxu0 0
        %1093 = vmatpush1.bf16.msra.mxu0 0
        %1094 = vmatprep.subr.bf16.mxu0 0
        %1095 = vmatpush1.bf16.msra.mxu0 0
        %1096 = vmatprep.subr.bf16.mxu0 0
        %1097 = vmatpush1.bf16.msra.mxu0 0
        %1098 = vmatprep.subr.bf16.mxu0 0
        %1099 = vmatpush1.bf16.msra.mxu0 0
        %1100 = vmatprep.subr.bf16.mxu0 0
        %1101 = vmatpush1.bf16.msra.mxu0 0
        %1102 = vmatprep.subr.bf16.mxu0 0
        %1103 = vmatpush1.bf16.msra.mxu0 0
        %1104 = vmatprep.subr.bf16.mxu0 0
        %1105 = vmatpush1.bf16.msra.mxu0 0
        %1106 = vmatprep.subr.bf16.mxu0 0
        %1107 = vmatpush1.bf16.msra.mxu0 0
        %1108 = vmatprep.mubr.bf16.mxu0 0
        %1109 = vmatmul.mubr.bf16.gmra.mrb[0].mxu0 %v1074
        %v1110 = vpop.f32.mrb[0].mxu0
        %v1111 = vadd.f32 %v1044, %v1110
        %v1112 = vpop.f32.mrb[0].mxu0
        %v1113 = vpop.f32.mrb[0].mxu0
        %v1114 = vpop.f32.mrb[0].mxu0
        %1115 = vdwg.mxu0
        %v1116 = vpack.c.bf16 %v962, %v962
        %s1117 = scalar_lea.vmem [#allocation11], 64
        %v1118 = vld [vmem:[%s1117] sm:$0xf]
        %v1119 = vld [vmem:[%s1117 + $0x4] sm:$0xf]
        %v1120 = vld [vmem:[%s1117 + $0x8] sm:$0xf]
        %v1121 = vld [vmem:[%s1117 + $0xc] sm:$0xf]
        %v1122 = vld [vmem:[%s1117 + $0x10] sm:$0xf]
        %v1123 = vld [vmem:[%s1117 + $0x14] sm:$0xf]
        %v1124 = vld [vmem:[%s1117 + $0x18] sm:$0xf]
        %v1125 = vld [vmem:[%s1117 + $0x1c] sm:$0xf]
        %v1134 = vunpack.c.l.b16 %v1118
        %v1135 = vunpack.c.l.b16 %v1119
        %v1136 = vunpack.c.l.b16 %v1120
        %v1137 = vunpack.c.l.b16 %v1121
        %v1138 = vunpack.c.l.b16 %v1122
        %v1139 = vunpack.c.l.b16 %v1123
        %v1140 = vunpack.c.l.b16 %v1124
        %v1141 = vunpack.c.l.b16 %v1125
        %v1142 = vpack.c.b16 %v1135, %v1134
        %v1143 = vpack.c.b16 %v1137, %v1136
        %v1144 = vpack.c.b16 %v1139, %v1138
        %v1145 = vpack.c.b16 %v1141, %v1140
        %v1151 = vsel %vm757, %v1116, 0
        %1153 = vmatprep.subr.bf16.mxu0 0
        %1154 = vmatpush1.bf16.msra.mxu0 %v1142
        %1155 = vmatprep.subr.bf16.mxu0 0
        %1156 = vmatpush1.bf16.msra.mxu0 %v1143
        %1157 = vmatprep.subr.bf16.mxu0 0
        %1158 = vmatpush1.bf16.msra.mxu0 %v1144
        %1159 = vmatprep.subr.bf16.mxu0 0
        %1160 = vmatpush1.bf16.msra.mxu0 %v1145
        %1161 = vmatprep.subr.bf16.mxu0 0
        %1162 = vmatpush1.bf16.msra.mxu0 0
        %1163 = vmatprep.subr.bf16.mxu0 0
        %1164 = vmatpush1.bf16.msra.mxu0 0
        %1165 = vmatprep.subr.bf16.mxu0 0
        %1166 = vmatpush1.bf16.msra.mxu0 0
        %1167 = vmatprep.subr.bf16.mxu0 0
        %1168 = vmatpush1.bf16.msra.mxu0 0
        %1169 = vmatprep.subr.bf16.mxu0 0
        %1170 = vmatpush1.bf16.msra.mxu0 0
        %1171 = vmatprep.subr.bf16.mxu0 0
        %1172 = vmatpush1.bf16.msra.mxu0 0
        %1173 = vmatprep.subr.bf16.mxu0 0
        %1174 = vmatpush1.bf16.msra.mxu0 0
        %1175 = vmatprep.subr.bf16.mxu0 0
        %1176 = vmatpush1.bf16.msra.mxu0 0
        %1177 = vmatprep.subr.bf16.mxu0 0
        %1178 = vmatpush1.bf16.msra.mxu0 0
        %1179 = vmatprep.subr.bf16.mxu0 0
        %1180 = vmatpush1.bf16.msra.mxu0 0
        %1181 = vmatprep.subr.bf16.mxu0 0
        %1182 = vmatpush1.bf16.msra.mxu0 0
        %1183 = vmatprep.subr.bf16.mxu0 0
        %1184 = vmatpush1.bf16.msra.mxu0 0
        %1185 = vmatprep.mubr.bf16.mxu0 0
        %1186 = vmatmul.mubr.bf16.gmra.mrb[0].mxu0 %v1151
        %v1187 = vpop.f32.mrb[0].mxu0
        %v1188 = vadd.f32 0.0, %v1187
        %v1189 = vpop.f32.mrb[0].mxu0
        %v1190 = vpop.f32.mrb[0].mxu0
        %v1191 = vpop.f32.mrb[0].mxu0
        %1192 = vdwg.mxu0
        %v1193 = vadd.f32 %v1111, %v1188
        %v1194 = vlaneseq
        %v1195 = vshrl.u32 %v1194, 7
        %v1196 = vsub.s32 0, %v1195
        %v1197 = vrot.slane %v957, %v1196
        %v1198 = vmul.f32 %v1193, %v1197
        %v1199 = vlaneseq
        %v1200 = vshrl.u32 %v1199, 7
        %v1201 = vsub.s32 0, %v1200
        %v1202 = vrot.slane %v958, %v1201
        %v1203 = vadd.f32 %v1198, %v1202
        %v1204 = vadd.f32 %v1203, %v687
        %v1205 = vmax.f32 %v1204, 0.0
        %1206 = vst.msk [vmem:[%s395] sm:$0xff] %vm757, %v1205
        %s1207 = sand.u32 %s198, 1
        %s1208 = scalar_lea.sflag [#allocation5], %s1207
        %s1209 = sand.u32 %s198, 1
        %s1210 = smul.addr %s1209, 8
        %s1211 = scalar_lea.vmem [#allocation12], %s1210
        // Predicated region
        $region69: #{tpu_custom_call.1} parent=47 // pred_check
          %p1212 = pneg %p208
        $region70: #{tpu_custom_call.1} parent=47 // pred_check_branch
          %1214 = sbr.rel (%p1212) target = $region72
        $region71: #{tpu_custom_call.1} parent=47 // pred_region
          %s1216 = ssub.s32 128, 128
          %1217 = vsyncadd %s1208, %s1216
          %s1218 = smul.addr %s28, 128
          %s1219 = scalar_lea.hbm %s7, %s1218
          %s1221 = sshll.u32 %s1211, 4
          %s1222 = int_to_ptr.vmem [resolvable:$true] %s1221
          %1224 = dma.vmem_to_hbm [thread:$0]  %s1222, 128, %s1219, %s1208
        $region72: #{tpu_custom_call.1} parent=47 // pred_fallthru
          _
      $region48: #{tpu_custom_call.1} parent=5 // pred_fallthru
        _
      %p1225 = scmp.le.s32.totalorder 2, %s23
      // Predicated region
      $region73: #{tpu_custom_call.1} parent=5 // pred_check
        %p1226 = pneg %p1225
      $region74: #{tpu_custom_call.1} parent=5 // pred_check_branch
        %1228 = sbr.rel (%p1226) target = $region76
      $region75: #{tpu_custom_call.1} parent=5 // pred_region
        %s1229 = ssub.s32 %s23, 2
        // Predicated region
        $region77: #{tpu_custom_call.1} parent=75 // pred_check
          %p1230 = pneg %p214
        $region78: #{tpu_custom_call.1} parent=75 // pred_check_branch
          %1232 = sbr.rel (%p1230) target = $region80
        $region79: #{tpu_custom_call.1} parent=75 // pred_region
          %s1233 = sand.u32 %s199, 1
          %s1234 = scalar_lea.sflag [#allocation5], %s1233
          %s1235 = sand.u32 %s199, 1
          %s1236 = smul.addr %s1235, 8
          %s1237 = scalar_lea.vmem [#allocation12], %s1236
          %1238 = dma.done %s1234, 128
        $region80: #{tpu_custom_call.1} parent=75 // pred_fallthru
          _
      $region76: #{tpu_custom_call.1} parent=5 // pred_fallthru
        _
    $region6: #{tpu_custom_call.1} parent=1 // loop_footer
      %s27 = sadd.s32 1, %s23
    $region7: #{tpu_custom_call.1} parent=1 // loop_footer_branch
      %22 = sbr.rel target = $region3
    $region8: #{tpu_custom_call.1} parent=1 // loop_exit
      _
    %1239 = vsyncpa [#allocation4], 1
    %s1240 = scalar_lea.sflag [#allocation4], 1
    %1241 = vsyncpa %s1240, 1
    %1242 = vsyncpa [#allocation7], 1
    %s1243 = scalar_lea.sflag [#allocation7], 1
    %1244 = vsyncpa %s1243, 1
    %1245 = vsyncpa [#allocation10], 1
    %1246 = vsyncpa [#allocation5], 1
    %s1247 = scalar_lea.sflag [#allocation5], 1
    %1248 = vsyncpa %s1247, 1

</llo_original>
